<compile_context>
chip_gen: v5e
topology: v5e:2x2
jax: 0.10.0
libtpu: 0.0.40
codegen_flags: <defaults>
</compile_context>

<pallas_src>
import jax
import jax.numpy as jnp
from jax.experimental import pallas as pl
from jax.experimental.pallas import tpu as pltpu

LOG_STD_MIN = -20.0
LOG_STD_MAX = 2.0
_F32_BIG = float(jnp.finfo(jnp.float32).max)


# --------------------------------------------------------------------------
# Kernel
# --------------------------------------------------------------------------
def _policy_kernel(x_ref,
                   w1_ref, b1_ref, w2_ref, b2_ref,
                   w3_ref, b3_ref, w4_ref, b4_ref,
                   wh_ref, bh_ref, lo_ref, hi_ref,
                   out_ref):
    """4x (matmul + bias + ReLU) trunk + fused (mean|log_std) head, in VMEM."""

    def linear(a, w_ref, b_ref):
        # bf16 operands on the MXU, f32 accumulation; bias add on the VPU.
        return jnp.dot(a.astype(w_ref.dtype), w_ref[...],
                       preferred_element_type=jnp.float32) + b_ref[...]

    h = jnp.maximum(linear(x_ref[...], w1_ref, b1_ref), 0.0)
    h = jnp.maximum(linear(h, w2_ref, b2_ref), 0.0)
    h = jnp.maximum(linear(h, w3_ref, b3_ref), 0.0)
    h = jnp.maximum(linear(h, w4_ref, b4_ref), 0.0)

    # Fused head: cols [0, A) = mean, [A, 2A) = log_std, rest = zero pad.
    # lo/hi rows are +/-FLT_MAX on mean/pad columns and
    # [LOG_STD_MIN, LOG_STD_MAX] on log_std columns, so the clamp is one
    # broadcast max + one broadcast min (no iota / int compares / select).
    out = linear(h, wh_ref, bh_ref)
    out_ref[...] = jnp.minimum(jnp.maximum(out, lo_ref[...]), hi_ref[...])


# --------------------------------------------------------------------------
# Host-side helpers
# --------------------------------------------------------------------------
def _tpu_generation():
    try:
        kind = jax.devices()[0].device_kind.lower()
    except Exception:
        return None
    for gen in ("v7", "v6", "v5"):
        if gen in kind:
            return gen
    return None


def _pick_batch_tile(n, generation):
    """Generation-aware batch tile; >=2 grid steps preferred on v7x."""
    cap = 1024 if generation in ("v5", "v6") else 512
    candidates = [c for c in (1024, 512, 256, 128, 64, 32, 16, 8) if c <= cap]
    if generation == "v7":
        # Prefer >= 2 grid steps so the "parallel" batch axis spans both TCs.
        for tm in candidates:
            if n % tm == 0 and n // tm >= 2:
                return tm
    for tm in candidates:
        if n % tm == 0:
            return tm
    return n  # odd/small batch: single full block (== array dim -> legal)


def _vmem_limit_bytes(resident_bytes, tm, num_inputs, hidden, head_pad, gen):
    streamed = 2 * tm * num_inputs * 2       # bf16 state tile, double-buffered
    streamed += 2 * tm * head_pad * 4        # f32 output tile, double-buffered
    interm = 2 * tm * hidden * 4             # two live f32 trunk intermediates
    budget = resident_bytes + streamed + interm + (4 << 20)  # + headroom
    cap = (56 << 20) if gen == "v7" else (100 << 20)
    return int(min(max(budget, 32 << 20), cap))


def _resident_spec(shape, single_buffer):
    index_map = lambda i: (0,) * len(shape)
    if single_buffer:
        try:
            return pl.BlockSpec(shape, index_map, pipeline_mode=pl.Buffered(1))
        except TypeError:
            pass
    return pl.BlockSpec(shape, index_map)


# --------------------------------------------------------------------------
# Forward pass
# --------------------------------------------------------------------------
def policy_forward(state, params, num_actions):
    """state: (N, num_inputs).  Returns (mean, log_std), each (N, A) f32."""
    n, num_inputs = state.shape
    hidden = params["w1"].shape[1]
    head_pad = params["wh"].shape[1]

    gen = _tpu_generation()
    tm = _pick_batch_tile(n, gen)
    grid = (n // tm,)

    # Stream the only per-row input as bf16 (the kernel consumes bf16 anyway).
    x = state.astype(jnp.bfloat16)

    weight_args = (params["w1"], params["b1"], params["w2"], params["b2"],
                   params["w3"], params["b3"], params["w4"], params["b4"],
                   params["wh"], params["bh"],
                   params["head_lo"], params["head_hi"])
    args = (x,) + weight_args

    resident_bytes = int(sum(a.nbytes for a in weight_args))
    vmem_limit = _vmem_limit_bytes(resident_bytes, tm, num_inputs, hidden,
                                   head_pad, gen)

    flops = 2 * n * (num_inputs * hidden + 3 * hidden * hidden
                     + hidden * head_pad)
    bytes_accessed = int(x.nbytes) + resident_bytes + n * head_pad * 4
    cost = pl.CostEstimate(flops=flops, transcendentals=0,
                           bytes_accessed=bytes_accessed)

    out_shape = jax.ShapeDtypeStruct((n, head_pad), jnp.float32)
    out_specs = pl.BlockSpec((tm, head_pad), lambda i: (i, 0))
    compiler_params = pltpu.CompilerParams(
        dimension_semantics=("parallel",),
        vmem_limit_bytes=vmem_limit,
    )

    def build(single_buffer):
        in_specs = ([pl.BlockSpec((tm, num_inputs), lambda i: (i, 0))]
                    + [_resident_spec(a.shape, single_buffer)
                       for a in weight_args])
        return pl.pallas_call(
            _policy_kernel,
            grid=grid,
            in_specs=in_specs,
            out_specs=out_specs,
            out_shape=out_shape,
            compiler_params=compiler_params,
            cost_estimate=cost,
        )

    try:
        out = jax.block_until_ready(build(single_buffer=True)(*args))
    except Exception:
        # Fallback for jax builds where pipeline_mode/Buffered(1) is not
        # supported on the top-level pallas_call pipeline.
        out = build(single_buffer=False)(*args)

    mean = out[:, :num_actions]
    log_std = out[:, num_actions:2 * num_actions]
    return mean, log_std


# --------------------------------------------------------------------------
# Parameter init (mirrors PolicyNetwork.__init__)
# --------------------------------------------------------------------------
def init_policy_params(key, num_inputs, hidden_size, num_actions, init_w=0.003):
    """Trunk linears: PyTorch-default uniform(+-1/sqrt(fan_in)); heads:
    uniform(+-init_w).  Weights stored transposed (in, out); trunk/heads in
    bf16, biases/clamp rows in f32.  hidden is zero-padded to a multiple of
    128 (lane-dense, numerically inert).  The two heads are fused and
    lane-padded into wh:(hidden_pad, head_pad), bh:(1, head_pad) with columns
    [0,A)=mean, [A,2A)=log_std, rest zero; head_lo/head_hi are the per-column
    clamp rows consumed by the kernel epilogue."""
    hidden_pad = max(128, ((hidden_size + 127) // 128) * 128)
    head_pad = max(128, ((2 * num_actions + 127) // 128) * 128)

    keys = jax.random.split(key, 12)

    def lin(kw, kb, fan_in, fan_out, bound, rows_pad, cols_pad):
        w = jax.random.uniform(kw, (fan_in, fan_out), jnp.float32, -bound, bound)
        b = jax.random.uniform(kb, (1, fan_out), jnp.float32, -bound, bound)
        w_p = jnp.zeros((rows_pad, cols_pad), jnp.float32)
        w_p = w_p.at[:fan_in, :fan_out].set(w)
        b_p = jnp.zeros((1, cols_pad), jnp.float32).at[:, :fan_out].set(b)
        return w_p, b_p

    w1, b1 = lin(keys[0], keys[1], num_inputs, hidden_size,
                 num_inputs ** -0.5, num_inputs, hidden_pad)
    w2, b2 = lin(keys[2], keys[3], hidden_size, hidden_size,
                 hidden_size ** -0.5, hidden_pad, hidden_pad)
    w3, b3 = lin(keys[4], keys[5], hidden_size, hidden_size,
                 hidden_size ** -0.5, hidden_pad, hidden_pad)
    w4, b4 = lin(keys[6], keys[7], hidden_size, hidden_size,
                 hidden_size ** -0.5, hidden_pad, hidden_pad)

    wm = jax.random.uniform(keys[8], (hidden_size, num_actions), jnp.float32,
                            -init_w, init_w)
    bm = jax.random.uniform(keys[9], (1, num_actions), jnp.float32,
                            -init_w, init_w)
    ws = jax.random.uniform(keys[10], (hidden_size, num_actions), jnp.float32,
                            -init_w, init_w)
    bs = jax.random.uniform(keys[11], (1, num_actions), jnp.float32,
                            -init_w, init_w)

    wh = jnp.zeros((hidden_pad, head_pad), jnp.float32)
    wh = wh.at[:hidden_size, :num_actions].set(wm)
    wh = wh.at[:hidden_size, num_actions:2 * num_actions].set(ws)
    bh = jnp.zeros((1, head_pad), jnp.float32)
    bh = bh.at[:, :num_actions].set(bm).at[:, num_actions:2 * num_actions].set(bs)

    col = jnp.arange(head_pad)
    is_log_std = (col >= num_actions) & (col < 2 * num_actions)
    head_lo = jnp.where(is_log_std, LOG_STD_MIN, -_F32_BIG)
    head_hi = jnp.where(is_log_std, LOG_STD_MAX, _F32_BIG)

    # TODO(synk): on v7x, fp8 trunk-weight storage (MXU-native) would halve
    # resident VMEM and per-call weight DMA; kept bf16 for parity on v5e/v6e.
    return {
        "w1": w1.astype(jnp.bfloat16), "b1": b1,
        "w2": w2.astype(jnp.bfloat16), "b2": b2,
        "w3": w3.astype(jnp.bfloat16), "b3": b3,
        "w4": w4.astype(jnp.bfloat16), "b4": b4,
        "wh": wh.astype(jnp.bfloat16), "bh": bh,
        "head_lo": head_lo.astype(jnp.float32)[None, :],
        "head_hi": head_hi.astype(jnp.float32)[None, :],
    }


# --------------------------------------------------------------------------
# Pure-JAX reference (identical numerics: bf16 operands, f32 accumulation)
# --------------------------------------------------------------------------
def policy_forward_ref(state, params, num_actions):
    h = state.astype(jnp.bfloat16)
    for i in (1, 2, 3, 4):
        w, b = params[f"w{i}"], params[f"b{i}"]
        h = jnp.maximum(
            jnp.dot(h.astype(w.dtype), w, preferred_element_type=jnp.float32) + b,
            0.0)
    wh, bh = params["wh"], params["bh"]
    out = jnp.dot(h.astype(wh.dtype), wh,
                  preferred_element_type=jnp.float32) + bh
    mean = out[:, :num_actions]
    log_std = jnp.clip(out[:, num_actions:2 * num_actions],
                       LOG_STD_MIN, LOG_STD_MAX)
    return mean, log_std


# --------------------------------------------------------------------------
# Demo / self-check
# --------------------------------------------------------------------------
if __name__ == "__main__":
    # Small forward-consistent shapes: batch=8, num_inputs=8, hidden=32, A=4.
    batch, num_inputs, hidden_size, num_actions = 8, 8, 32, 4

    key = jax.random.PRNGKey(0)
    k_state, k_params = jax.random.split(key)

    state = jax.random.normal(k_state, (batch, num_inputs), dtype=jnp.float32)
    params = init_policy_params(k_params, num_inputs, hidden_size, num_actions)

    mean, log_std = policy_forward(state, params, num_actions)
    jax.block_until_ready((mean, log_std))

    mean_ref, log_std_ref = policy_forward_ref(state, params, num_actions)
    assert mean.shape == (batch, num_actions)
    assert log_std.shape == (batch, num_actions)
    assert jnp.allclose(mean, mean_ref, atol=1e-3, rtol=1e-3)
    assert jnp.allclose(log_std, log_std_ref, atol=1e-3, rtol=1e-3)
    assert bool(jnp.all(log_std <= LOG_STD_MAX))
    assert bool(jnp.all(log_std >= LOG_STD_MIN))

    # TODO(synk): the stochastic evaluate() (tanh-Normal sampling + log_prob)
    # stays in host-side JAX; only the deterministic forward() is a kernel.
    # TODO(synk): small-batch SAC rollouts are weight-DMA bound per call;
    # amortize by batching states per call or cross-call weight prefetch (P10).
    print("KERNEL_OK")
</pallas_src>

<mosaic_0001>
module attributes {stable_mosaic.version = 11 : i64} {
  func.func @_policy_kernel(%arg0: i32, %arg1: memref<8x8xbf16, #tpu.memory_space<vmem>>, %arg2: memref<8x128xbf16, #tpu.memory_space<vmem>>, %arg3: memref<1x128xf32, #tpu.memory_space<vmem>>, %arg4: memref<128x128xbf16, #tpu.memory_space<vmem>>, %arg5: memref<1x128xf32, #tpu.memory_space<vmem>>, %arg6: memref<128x128xbf16, #tpu.memory_space<vmem>>, %arg7: memref<1x128xf32, #tpu.memory_space<vmem>>, %arg8: memref<128x128xbf16, #tpu.memory_space<vmem>>, %arg9: memref<1x128xf32, #tpu.memory_space<vmem>>, %arg10: memref<128x128xbf16, #tpu.memory_space<vmem>>, %arg11: memref<1x128xf32, #tpu.memory_space<vmem>>, %arg12: memref<1x128xf32, #tpu.memory_space<vmem>>, %arg13: memref<1x128xf32, #tpu.memory_space<vmem>>, %arg14: memref<8x128xf32, #tpu.memory_space<vmem>>) attributes {dimension_semantics = [#tpu.dimension_semantics<parallel>], iteration_bounds = array<i64: 1>, scalar_prefetch = 0 : i64, scratch_operands = 0 : i64, tpu.core_type = #tpu.core_type<tc>, window_params = [{transform_indices = @transform_0, window_bounds = array<i64: 8, 8>}, {pipeline_mode = #tpu.pipeline_mode<synchronous>, transform_indices = @transform_1, window_bounds = array<i64: 8, 128>}, {pipeline_mode = #tpu.pipeline_mode<synchronous>, transform_indices = @transform_2, window_bounds = array<i64: 1, 128>}, {pipeline_mode = #tpu.pipeline_mode<synchronous>, transform_indices = @transform_3, window_bounds = array<i64: 128, 128>}, {pipeline_mode = #tpu.pipeline_mode<synchronous>, transform_indices = @transform_4, window_bounds = array<i64: 1, 128>}, {pipeline_mode = #tpu.pipeline_mode<synchronous>, transform_indices = @transform_5, window_bounds = array<i64: 128, 128>}, {pipeline_mode = #tpu.pipeline_mode<synchronous>, transform_indices = @transform_6, window_bounds = array<i64: 1, 128>}, {pipeline_mode = #tpu.pipeline_mode<synchronous>, transform_indices = @transform_7, window_bounds = array<i64: 128, 128>}, {pipeline_mode = #tpu.pipeline_mode<synchronous>, transform_indices = @transform_8, window_bounds = array<i64: 1, 128>}, {pipeline_mode = #tpu.pipeline_mode<synchronous>, transform_indices = @transform_9, window_bounds = array<i64: 128, 128>}, {pipeline_mode = #tpu.pipeline_mode<synchronous>, transform_indices = @transform_10, window_bounds = array<i64: 1, 128>}, {pipeline_mode = #tpu.pipeline_mode<synchronous>, transform_indices = @transform_11, window_bounds = array<i64: 1, 128>}, {pipeline_mode = #tpu.pipeline_mode<synchronous>, transform_indices = @transform_12, window_bounds = array<i64: 1, 128>}, {transform_indices = @transform_13, window_bounds = array<i64: 8, 128>}]} {
    %c0 = arith.constant 0 : index
    %c0_0 = arith.constant 0 : index
    %0 = vector.load %arg1[%c0, %c0_0] : memref<8x8xbf16, #tpu.memory_space<vmem>>, vector<8x8xbf16>
    %c0_1 = arith.constant 0 : index
    %c0_2 = arith.constant 0 : index
    %1 = vector.load %arg2[%c0_1, %c0_2] : memref<8x128xbf16, #tpu.memory_space<vmem>>, vector<8x128xbf16>
    %cst = arith.constant dense<0.000000e+00> : vector<8x128xf32>
    %2 = tpu.matmul %0, %1, %cst {dimension_numbers = #tpu.dot_dimension_numbers<[1], [0], [0], [1], [0, 0, 1, 1], [], []>} : vector<8x8xbf16>, vector<8x128xbf16>, vector<8x128xf32> -> vector<8x128xf32>
    %c0_3 = arith.constant 0 : index
    %c0_4 = arith.constant 0 : index
    %3 = vector.load %arg3[%c0_3, %c0_4] : memref<1x128xf32, #tpu.memory_space<vmem>>, vector<1x128xf32>
    %4 = vector.broadcast %3 : vector<1x128xf32> to vector<8x128xf32>
    %5 = arith.addf %2, %4 : vector<8x128xf32>
    %cst_5 = arith.constant 0.000000e+00 : f32
    %6 = vector.broadcast %cst_5 : f32 to vector<8x128xf32>
    %7 = arith.maximumf %5, %6 : vector<8x128xf32>
    %8 = arith.truncf %7 : vector<8x128xf32> to vector<8x128xbf16>
    %c0_6 = arith.constant 0 : index
    %c0_7 = arith.constant 0 : index
    %9 = vector.load %arg4[%c0_6, %c0_7] : memref<128x128xbf16, #tpu.memory_space<vmem>>, vector<128x128xbf16>
    %cst_8 = arith.constant dense<0.000000e+00> : vector<8x128xf32>
    %10 = tpu.matmul %8, %9, %cst_8 {dimension_numbers = #tpu.dot_dimension_numbers<[1], [0], [0], [1], [0, 0, 1, 1], [], []>} : vector<8x128xbf16>, vector<128x128xbf16>, vector<8x128xf32> -> vector<8x128xf32>
    %c0_9 = arith.constant 0 : index
    %c0_10 = arith.constant 0 : index
    %11 = vector.load %arg5[%c0_9, %c0_10] : memref<1x128xf32, #tpu.memory_space<vmem>>, vector<1x128xf32>
    %12 = vector.broadcast %11 : vector<1x128xf32> to vector<8x128xf32>
    %13 = arith.addf %10, %12 : vector<8x128xf32>
    %cst_11 = arith.constant 0.000000e+00 : f32
    %14 = vector.broadcast %cst_11 : f32 to vector<8x128xf32>
    %15 = arith.maximumf %13, %14 : vector<8x128xf32>
    %16 = arith.truncf %15 : vector<8x128xf32> to vector<8x128xbf16>
    %c0_12 = arith.constant 0 : index
    %c0_13 = arith.constant 0 : index
    %17 = vector.load %arg6[%c0_12, %c0_13] : memref<128x128xbf16, #tpu.memory_space<vmem>>, vector<128x128xbf16>
    %cst_14 = arith.constant dense<0.000000e+00> : vector<8x128xf32>
    %18 = tpu.matmul %16, %17, %cst_14 {dimension_numbers = #tpu.dot_dimension_numbers<[1], [0], [0], [1], [0, 0, 1, 1], [], []>} : vector<8x128xbf16>, vector<128x128xbf16>, vector<8x128xf32> -> vector<8x128xf32>
    %c0_15 = arith.constant 0 : index
    %c0_16 = arith.constant 0 : index
    %19 = vector.load %arg7[%c0_15, %c0_16] : memref<1x128xf32, #tpu.memory_space<vmem>>, vector<1x128xf32>
    %20 = vector.broadcast %19 : vector<1x128xf32> to vector<8x128xf32>
    %21 = arith.addf %18, %20 : vector<8x128xf32>
    %cst_17 = arith.constant 0.000000e+00 : f32
    %22 = vector.broadcast %cst_17 : f32 to vector<8x128xf32>
    %23 = arith.maximumf %21, %22 : vector<8x128xf32>
    %24 = arith.truncf %23 : vector<8x128xf32> to vector<8x128xbf16>
    %c0_18 = arith.constant 0 : index
    %c0_19 = arith.constant 0 : index
    %25 = vector.load %arg8[%c0_18, %c0_19] : memref<128x128xbf16, #tpu.memory_space<vmem>>, vector<128x128xbf16>
    %cst_20 = arith.constant dense<0.000000e+00> : vector<8x128xf32>
    %26 = tpu.matmul %24, %25, %cst_20 {dimension_numbers = #tpu.dot_dimension_numbers<[1], [0], [0], [1], [0, 0, 1, 1], [], []>} : vector<8x128xbf16>, vector<128x128xbf16>, vector<8x128xf32> -> vector<8x128xf32>
    %c0_21 = arith.constant 0 : index
    %c0_22 = arith.constant 0 : index
    %27 = vector.load %arg9[%c0_21, %c0_22] : memref<1x128xf32, #tpu.memory_space<vmem>>, vector<1x128xf32>
    %28 = vector.broadcast %27 : vector<1x128xf32> to vector<8x128xf32>
    %29 = arith.addf %26, %28 : vector<8x128xf32>
    %cst_23 = arith.constant 0.000000e+00 : f32
    %30 = vector.broadcast %cst_23 : f32 to vector<8x128xf32>
    %31 = arith.maximumf %29, %30 : vector<8x128xf32>
    %32 = arith.truncf %31 : vector<8x128xf32> to vector<8x128xbf16>
    %c0_24 = arith.constant 0 : index
    %c0_25 = arith.constant 0 : index
    %33 = vector.load %arg10[%c0_24, %c0_25] : memref<128x128xbf16, #tpu.memory_space<vmem>>, vector<128x128xbf16>
    %cst_26 = arith.constant dense<0.000000e+00> : vector<8x128xf32>
    %34 = tpu.matmul %32, %33, %cst_26 {dimension_numbers = #tpu.dot_dimension_numbers<[1], [0], [0], [1], [0, 0, 1, 1], [], []>} : vector<8x128xbf16>, vector<128x128xbf16>, vector<8x128xf32> -> vector<8x128xf32>
    %c0_27 = arith.constant 0 : index
    %c0_28 = arith.constant 0 : index
    %35 = vector.load %arg11[%c0_27, %c0_28] : memref<1x128xf32, #tpu.memory_space<vmem>>, vector<1x128xf32>
    %36 = vector.broadcast %35 : vector<1x128xf32> to vector<8x128xf32>
    %37 = arith.addf %34, %36 : vector<8x128xf32>
    %c0_29 = arith.constant 0 : index
    %c0_30 = arith.constant 0 : index
    %38 = vector.load %arg12[%c0_29, %c0_30] : memref<1x128xf32, #tpu.memory_space<vmem>>, vector<1x128xf32>
    %39 = vector.broadcast %38 : vector<1x128xf32> to vector<8x128xf32>
    %40 = arith.maximumf %37, %39 : vector<8x128xf32>
    %c0_31 = arith.constant 0 : index
    %c0_32 = arith.constant 0 : index
    %41 = vector.load %arg13[%c0_31, %c0_32] : memref<1x128xf32, #tpu.memory_space<vmem>>, vector<1x128xf32>
    %42 = vector.broadcast %41 : vector<1x128xf32> to vector<8x128xf32>
    %43 = arith.minimumf %40, %42 : vector<8x128xf32>
    %c0_33 = arith.constant 0 : index
    %c0_34 = arith.constant 0 : index
    %44 = vector.load %arg14[%c0_33, %c0_34] : memref<8x128xf32, #tpu.memory_space<vmem>>, vector<8x128xf32>
    tpu.vector_store %arg14[%c0_33, %c0_34], %43 {strides = array<i32>} : memref<8x128xf32, #tpu.memory_space<vmem>>, vector<8x128xf32>,
    return
  }
  func.func @transform_0(%arg0: i32) -> (i32, i32) {
    %c0_i32 = arith.constant 0 : i32
    %c0_i32_0 = arith.constant 0 : i32
    return %arg0, %c0_i32 : i32, i32
  }
  func.func @transform_1(%arg0: i32) -> (i32, i32) {
    %c0_i32 = arith.constant 0 : i32
    %c0_i32_0 = arith.constant 0 : i32
    %c0_i32_1 = arith.constant 0 : i32
    return %c0_i32, %c0_i32_0 : i32, i32
  }
  func.func @transform_2(%arg0: i32) -> (i32, i32) {
    %c0_i32 = arith.constant 0 : i32
    %c0_i32_0 = arith.constant 0 : i32
    %c0_i32_1 = arith.constant 0 : i32
    return %c0_i32, %c0_i32_0 : i32, i32
  }
  func.func @transform_3(%arg0: i32) -> (i32, i32) {
    %c0_i32 = arith.constant 0 : i32
    %c0_i32_0 = arith.constant 0 : i32
    %c0_i32_1 = arith.constant 0 : i32
    return %c0_i32, %c0_i32_0 : i32, i32
  }
  func.func @transform_4(%arg0: i32) -> (i32, i32) {
    %c0_i32 = arith.constant 0 : i32
    %c0_i32_0 = arith.constant 0 : i32
    %c0_i32_1 = arith.constant 0 : i32
    return %c0_i32, %c0_i32_0 : i32, i32
  }
  func.func @transform_5(%arg0: i32) -> (i32, i32) {
    %c0_i32 = arith.constant 0 : i32
    %c0_i32_0 = arith.constant 0 : i32
    %c0_i32_1 = arith.constant 0 : i32
    return %c0_i32, %c0_i32_0 : i32, i32
  }
  func.func @transform_6(%arg0: i32) -> (i32, i32) {
    %c0_i32 = arith.constant 0 : i32
    %c0_i32_0 = arith.constant 0 : i32
    %c0_i32_1 = arith.constant 0 : i32
    return %c0_i32, %c0_i32_0 : i32, i32
  }
  func.func @transform_7(%arg0: i32) -> (i32, i32) {
    %c0_i32 = arith.constant 0 : i32
    %c0_i32_0 = arith.constant 0 : i32
    %c0_i32_1 = arith.constant 0 : i32
    return %c0_i32, %c0_i32_0 : i32, i32
  }
  func.func @transform_8(%arg0: i32) -> (i32, i32) {
    %c0_i32 = arith.constant 0 : i32
    %c0_i32_0 = arith.constant 0 : i32
    %c0_i32_1 = arith.constant 0 : i32
    return %c0_i32, %c0_i32_0 : i32, i32
  }
  func.func @transform_9(%arg0: i32) -> (i32, i32) {
    %c0_i32 = arith.constant 0 : i32
    %c0_i32_0 = arith.constant 0 : i32
    %c0_i32_1 = arith.constant 0 : i32
    return %c0_i32, %c0_i32_0 : i32, i32
  }
  func.func @transform_10(%arg0: i32) -> (i32, i32) {
    %c0_i32 = arith.constant 0 : i32
    %c0_i32_0 = arith.constant 0 : i32
    %c0_i32_1 = arith.constant 0 : i32
    return %c0_i32, %c0_i32_0 : i32, i32
  }
  func.func @transform_11(%arg0: i32) -> (i32, i32) {
    %c0_i32 = arith.constant 0 : i32
    %c0_i32_0 = arith.constant 0 : i32
    %c0_i32_1 = arith.constant 0 : i32
    return %c0_i32, %c0_i32_0 : i32, i32
  }
  func.func @transform_12(%arg0: i32) -> (i32, i32) {
    %c0_i32 = arith.constant 0 : i32
    %c0_i32_0 = arith.constant 0 : i32
    %c0_i32_1 = arith.constant 0 : i32
    return %c0_i32, %c0_i32_0 : i32, i32
  }
  func.func @transform_13(%arg0: i32) -> (i32, i32) {
    %c0_i32 = arith.constant 0 : i32
    %c0_i32_0 = arith.constant 0 : i32
    return %arg0, %c0_i32 : i32, i32
  }
}

module attributes {stable_mosaic.version = 11 : i64} {
  func.func @_policy_kernel(%arg0: i32, %arg1: memref<8x8xbf16, #tpu.memory_space<vmem>>, %arg2: memref<8x128xbf16, #tpu.memory_space<vmem>>, %arg3: memref<1x128xf32, #tpu.memory_space<vmem>>, %arg4: memref<128x128xbf16, #tpu.memory_space<vmem>>, %arg5: memref<1x128xf32, #tpu.memory_space<vmem>>, %arg6: memref<128x128xbf16, #tpu.memory_space<vmem>>, %arg7: memref<1x128xf32, #tpu.memory_space<vmem>>, %arg8: memref<128x128xbf16, #tpu.memory_space<vmem>>, %arg9: memref<1x128xf32, #tpu.memory_space<vmem>>, %arg10: memref<128x128xbf16, #tpu.memory_space<vmem>>, %arg11: memref<1x128xf32, #tpu.memory_space<vmem>>, %arg12: memref<1x128xf32, #tpu.memory_space<vmem>>, %arg13: memref<1x128xf32, #tpu.memory_space<vmem>>, %arg14: memref<8x128xf32, #tpu.memory_space<vmem>>) attributes {dimension_semantics = [#tpu.dimension_semantics<parallel>], iteration_bounds = array<i64: 1>, scalar_prefetch = 0 : i64, scratch_operands = 0 : i64, tpu.core_type = #tpu.core_type<tc>, window_params = [{transform_indices = @transform_0, window_bounds = array<i64: 8, 8>}, {pipeline_mode = #tpu.pipeline_mode<synchronous>, transform_indices = @transform_1, window_bounds = array<i64: 8, 128>}, {pipeline_mode = #tpu.pipeline_mode<synchronous>, transform_indices = @transform_2, window_bounds = array<i64: 1, 128>}, {pipeline_mode = #tpu.pipeline_mode<synchronous>, transform_indices = @transform_3, window_bounds = array<i64: 128, 128>}, {pipeline_mode = #tpu.pipeline_mode<synchronous>, transform_indices = @transform_4, window_bounds = array<i64: 1, 128>}, {pipeline_mode = #tpu.pipeline_mode<synchronous>, transform_indices = @transform_5, window_bounds = array<i64: 128, 128>}, {pipeline_mode = #tpu.pipeline_mode<synchronous>, transform_indices = @transform_6, window_bounds = array<i64: 1, 128>}, {pipeline_mode = #tpu.pipeline_mode<synchronous>, transform_indices = @transform_7, window_bounds = array<i64: 128, 128>}, {pipeline_mode = #tpu.pipeline_mode<synchronous>, transform_indices = @transform_8, window_bounds = array<i64: 1, 128>}, {pipeline_mode = #tpu.pipeline_mode<synchronous>, transform_indices = @transform_9, window_bounds = array<i64: 128, 128>}, {pipeline_mode = #tpu.pipeline_mode<synchronous>, transform_indices = @transform_10, window_bounds = array<i64: 1, 128>}, {pipeline_mode = #tpu.pipeline_mode<synchronous>, transform_indices = @transform_11, window_bounds = array<i64: 1, 128>}, {pipeline_mode = #tpu.pipeline_mode<synchronous>, transform_indices = @transform_12, window_bounds = array<i64: 1, 128>}, {transform_indices = @transform_13, window_bounds = array<i64: 8, 128>}]} {
    %c0 = arith.constant 0 : index
    %c0_0 = arith.constant 0 : index
    %0 = vector.load %arg1[%c0, %c0_0] : memref<8x8xbf16, #tpu.memory_space<vmem>>, vector<8x8xbf16>
    %c0_1 = arith.constant 0 : index
    %c0_2 = arith.constant 0 : index
    %1 = vector.load %arg2[%c0_1, %c0_2] : memref<8x128xbf16, #tpu.memory_space<vmem>>, vector<8x128xbf16>
    %cst = arith.constant dense<0.000000e+00> : vector<8x128xf32>
    %2 = tpu.matmul %0, %1, %cst {dimension_numbers = #tpu.dot_dimension_numbers<[1], [0], [0], [1], [0, 0, 1, 1], [], []>} : vector<8x8xbf16>, vector<8x128xbf16>, vector<8x128xf32> -> vector<8x128xf32>
    %c0_3 = arith.constant 0 : index
    %c0_4 = arith.constant 0 : index
    %3 = vector.load %arg3[%c0_3, %c0_4] : memref<1x128xf32, #tpu.memory_space<vmem>>, vector<1x128xf32>
    %4 = vector.broadcast %3 : vector<1x128xf32> to vector<8x128xf32>
    %5 = arith.addf %2, %4 : vector<8x128xf32>
    %cst_5 = arith.constant 0.000000e+00 : f32
    %6 = vector.broadcast %cst_5 : f32 to vector<8x128xf32>
    %7 = arith.maximumf %5, %6 : vector<8x128xf32>
    %8 = arith.truncf %7 : vector<8x128xf32> to vector<8x128xbf16>
    %c0_6 = arith.constant 0 : index
    %c0_7 = arith.constant 0 : index
    %9 = vector.load %arg4[%c0_6, %c0_7] : memref<128x128xbf16, #tpu.memory_space<vmem>>, vector<128x128xbf16>
    %cst_8 = arith.constant dense<0.000000e+00> : vector<8x128xf32>
    %10 = tpu.matmul %8, %9, %cst_8 {dimension_numbers = #tpu.dot_dimension_numbers<[1], [0], [0], [1], [0, 0, 1, 1], [], []>} : vector<8x128xbf16>, vector<128x128xbf16>, vector<8x128xf32> -> vector<8x128xf32>
    %c0_9 = arith.constant 0 : index
    %c0_10 = arith.constant 0 : index
    %11 = vector.load %arg5[%c0_9, %c0_10] : memref<1x128xf32, #tpu.memory_space<vmem>>, vector<1x128xf32>
    %12 = vector.broadcast %11 : vector<1x128xf32> to vector<8x128xf32>
    %13 = arith.addf %10, %12 : vector<8x128xf32>
    %cst_11 = arith.constant 0.000000e+00 : f32
    %14 = vector.broadcast %cst_11 : f32 to vector<8x128xf32>
    %15 = arith.maximumf %13, %14 : vector<8x128xf32>
    %16 = arith.truncf %15 : vector<8x128xf32> to vector<8x128xbf16>
    %c0_12 = arith.constant 0 : index
    %c0_13 = arith.constant 0 : index
    %17 = vector.load %arg6[%c0_12, %c0_13] : memref<128x128xbf16, #tpu.memory_space<vmem>>, vector<128x128xbf16>
    %cst_14 = arith.constant dense<0.000000e+00> : vector<8x128xf32>
    %18 = tpu.matmul %16, %17, %cst_14 {dimension_numbers = #tpu.dot_dimension_numbers<[1], [0], [0], [1], [0, 0, 1, 1], [], []>} : vector<8x128xbf16>, vector<128x128xbf16>, vector<8x128xf32> -> vector<8x128xf32>
    %c0_15 = arith.constant 0 : index
    %c0_16 = arith.constant 0 : index
    %19 = vector.load %arg7[%c0_15, %c0_16] : memref<1x128xf32, #tpu.memory_space<vmem>>, vector<1x128xf32>
    %20 = vector.broadcast %19 : vector<1x128xf32> to vector<8x128xf32>
    %21 = arith.addf %18, %20 : vector<8x128xf32>
    %cst_17 = arith.constant 0.000000e+00 : f32
    %22 = vector.broadcast %cst_17 : f32 to vector<8x128xf32>
    %23 = arith.maximumf %21, %22 : vector<8x128xf32>
    %24 = arith.truncf %23 : vector<8x128xf32> to vector<8x128xbf16>
    %c0_18 = arith.constant 0 : index
    %c0_19 = arith.constant 0 : index
    %25 = vector.load %arg8[%c0_18, %c0_19] : memref<128x128xbf16, #tpu.memory_space<vmem>>, vector<128x128xbf16>
    %cst_20 = arith.constant dense<0.000000e+00> : vector<8x128xf32>
    %26 = tpu.matmul %24, %25, %cst_20 {dimension_numbers = #tpu.dot_dimension_numbers<[1], [0], [0], [1], [0, 0, 1, 1], [], []>} : vector<8x128xbf16>, vector<128x128xbf16>, vector<8x128xf32> -> vector<8x128xf32>
    %c0_21 = arith.constant 0 : index
    %c0_22 = arith.constant 0 : index
    %27 = vector.load %arg9[%c0_21, %c0_22] : memref<1x128xf32, #tpu.memory_space<vmem>>, vector<1x128xf32>
    %28 = vector.broadcast %27 : vector<1x128xf32> to vector<8x128xf32>
    %29 = arith.addf %26, %28 : vector<8x128xf32>
    %cst_23 = arith.constant 0.000000e+00 : f32
    %30 = vector.broadcast %cst_23 : f32 to vector<8x128xf32>
    %31 = arith.maximumf %29, %30 : vector<8x128xf32>
    %32 = arith.truncf %31 : vector<8x128xf32> to vector<8x128xbf16>
    %c0_24 = arith.constant 0 : index
    %c0_25 = arith.constant 0 : index
    %33 = vector.load %arg10[%c0_24, %c0_25] : memref<128x128xbf16, #tpu.memory_space<vmem>>, vector<128x128xbf16>
    %cst_26 = arith.constant dense<0.000000e+00> : vector<8x128xf32>
    %34 = tpu.matmul %32, %33, %cst_26 {dimension_numbers = #tpu.dot_dimension_numbers<[1], [0], [0], [1], [0, 0, 1, 1], [], []>} : vector<8x128xbf16>, vector<128x128xbf16>, vector<8x128xf32> -> vector<8x128xf32>
    %c0_27 = arith.constant 0 : index
    %c0_28 = arith.constant 0 : index
    %35 = vector.load %arg11[%c0_27, %c0_28] : memref<1x128xf32, #tpu.memory_space<vmem>>, vector<1x128xf32>
    %36 = vector.broadcast %35 : vector<1x128xf32> to vector<8x128xf32>
    %37 = arith.addf %34, %36 : vector<8x128xf32>
    %c0_29 = arith.constant 0 : index
    %c0_30 = arith.constant 0 : index
    %38 = vector.load %arg12[%c0_29, %c0_30] : memref<1x128xf32, #tpu.memory_space<vmem>>, vector<1x128xf32>
    %39 = vector.broadcast %38 : vector<1x128xf32> to vector<8x128xf32>
    %40 = arith.maximumf %37, %39 : vector<8x128xf32>
    %c0_31 = arith.constant 0 : index
    %c0_32 = arith.constant 0 : index
    %41 = vector.load %arg13[%c0_31, %c0_32] : memref<1x128xf32, #tpu.memory_space<vmem>>, vector<1x128xf32>
    %42 = vector.broadcast %41 : vector<1x128xf32> to vector<8x128xf32>
    %43 = arith.minimumf %40, %42 : vector<8x128xf32>
    %c0_33 = arith.constant 0 : index
    %c0_34 = arith.constant 0 : index
    %44 = vector.load %arg14[%c0_33, %c0_34] : memref<8x128xf32, #tpu.memory_space<vmem>>, vector<8x128xf32>
    tpu.vector_store %arg14[%c0_33, %c0_34], %43 {strides = array<i32>} : memref<8x128xf32, #tpu.memory_space<vmem>>, vector<8x128xf32>,
    return
  }
  func.func @transform_0(%arg0: i32) -> (i32, i32) {
    %c0_i32 = arith.constant 0 : i32
    %c0_i32_0 = arith.constant 0 : i32
    return %arg0, %c0_i32 : i32, i32
  }
  func.func @transform_1(%arg0: i32) -> (i32, i32) {
    %c0_i32 = arith.constant 0 : i32
    %c0_i32_0 = arith.constant 0 : i32
    %c0_i32_1 = arith.constant 0 : i32
    return %c0_i32, %c0_i32_0 : i32, i32
  }
  func.func @transform_2(%arg0: i32) -> (i32, i32) {
    %c0_i32 = arith.constant 0 : i32
    %c0_i32_0 = arith.constant 0 : i32
    %c0_i32_1 = arith.constant 0 : i32
    return %c0_i32, %c0_i32_0 : i32, i32
  }
  func.func @transform_3(%arg0: i32) -> (i32, i32) {
    %c0_i32 = arith.constant 0 : i32
    %c0_i32_0 = arith.constant 0 : i32
    %c0_i32_1 = arith.constant 0 : i32
    return %c0_i32, %c0_i32_0 : i32, i32
  }
  func.func @transform_4(%arg0: i32) -> (i32, i32) {
    %c0_i32 = arith.constant 0 : i32
    %c0_i32_0 = arith.constant 0 : i32
    %c0_i32_1 = arith.constant 0 : i32
    return %c0_i32, %c0_i32_0 : i32, i32
  }
  func.func @transform_5(%arg0: i32) -> (i32, i32) {
    %c0_i32 = arith.constant 0 : i32
    %c0_i32_0 = arith.constant 0 : i32
    %c0_i32_1 = arith.constant 0 : i32
    return %c0_i32, %c0_i32_0 : i32, i32
  }
  func.func @transform_6(%arg0: i32) -> (i32, i32) {
    %c0_i32 = arith.constant 0 : i32
    %c0_i32_0 = arith.constant 0 : i32
    %c0_i32_1 = arith.constant 0 : i32
    return %c0_i32, %c0_i32_0 : i32, i32
  }
  func.func @transform_7(%arg0: i32) -> (i32, i32) {
    %c0_i32 = arith.constant 0 : i32
    %c0_i32_0 = arith.constant 0 : i32
    %c0_i32_1 = arith.constant 0 : i32
    return %c0_i32, %c0_i32_0 : i32, i32
  }
  func.func @transform_8(%arg0: i32) -> (i32, i32) {
    %c0_i32 = arith.constant 0 : i32
    %c0_i32_0 = arith.constant 0 : i32
    %c0_i32_1 = arith.constant 0 : i32
    return %c0_i32, %c0_i32_0 : i32, i32
  }
  func.func @transform_9(%arg0: i32) -> (i32, i32) {
    %c0_i32 = arith.constant 0 : i32
    %c0_i32_0 = arith.constant 0 : i32
    %c0_i32_1 = arith.constant 0 : i32
    return %c0_i32, %c0_i32_0 : i32, i32
  }
  func.func @transform_10(%arg0: i32) -> (i32, i32) {
    %c0_i32 = arith.constant 0 : i32
    %c0_i32_0 = arith.constant 0 : i32
    %c0_i32_1 = arith.constant 0 : i32
    return %c0_i32, %c0_i32_0 : i32, i32
  }
  func.func @transform_11(%arg0: i32) -> (i32, i32) {
    %c0_i32 = arith.constant 0 : i32
    %c0_i32_0 = arith.constant 0 : i32
    %c0_i32_1 = arith.constant 0 : i32
    return %c0_i32, %c0_i32_0 : i32, i32
  }
  func.func @transform_12(%arg0: i32) -> (i32, i32) {
    %c0_i32 = arith.constant 0 : i32
    %c0_i32_0 = arith.constant 0 : i32
    %c0_i32_1 = arith.constant 0 : i32
    return %c0_i32, %c0_i32_0 : i32, i32
  }
  func.func @transform_13(%arg0: i32) -> (i32, i32) {
    %c0_i32 = arith.constant 0 : i32
    %c0_i32_0 = arith.constant 0 : i32
    return %arg0, %c0_i32 : i32, i32
  }
}

</mosaic_0001>

<llo_original>
// kernel: tpu_custom_call.1
$region0: #{tpu_custom_call.1}
  #allocation0 [shape = 'u32[]', space=smem, size = 0x4, offset = 0x4, fixed_abs, tag = 'smem constant byte address 0x4 - core index']
  #allocation1 [shape = 'u32[72,128]{1,0:T(1,128)}', space=vmem, size = 0x9000, scoped, tag = 'internal scratch']
  %s0 = inlined_call_operand.hbm [shape: bf16[8,8], index: 0, kind: input, shape index: {}]
  %s1 = inlined_call_operand.hbm [shape: bf16[8,128], index: 1, kind: input, shape index: {}]
  %s2 = inlined_call_operand.vmem [shape: f32[1,128], index: 2, kind: input, shape index: {}]
  %s3 = inlined_call_operand.hbm [shape: bf16[128,128], index: 3, kind: input, shape index: {}]
  %s4 = inlined_call_operand.vmem [shape: f32[1,128], index: 4, kind: input, shape index: {}]
  %s5 = inlined_call_operand.hbm [shape: bf16[128,128], index: 5, kind: input, shape index: {}]
  %s6 = inlined_call_operand.vmem [shape: f32[1,128], index: 6, kind: input, shape index: {}]
  %s7 = inlined_call_operand.hbm [shape: bf16[128,128], index: 7, kind: input, shape index: {}]
  %s8 = inlined_call_operand.vmem [shape: f32[1,128], index: 8, kind: input, shape index: {}]
  %s9 = inlined_call_operand.hbm [shape: bf16[128,128], index: 9, kind: input, shape index: {}]
  %s10 = inlined_call_operand.vmem [shape: f32[1,128], index: 10, kind: input, shape index: {}]
  %s11 = inlined_call_operand.vmem [shape: f32[1,128], index: 11, kind: input, shape index: {}]
  %s12 = inlined_call_operand.vmem [shape: f32[1,128], index: 12, kind: input, shape index: {}]
  %s13 = inlined_call_operand.hbm [shape: f32[8,128], index: 13, kind: output, shape index: {}]
  %s14 = sld [smem:[#allocation0]]
  $region86: #{tpu_custom_call.1} parent=0
    _
  %s16 = ssub.s32 1, %s14
  %s17 = scalar_select 0, %s16, %s14
  $region1: #{tpu_custom_call.1} parent=0
    #allocation2 [shape = 'u8[2048]{0}', space=vmem, size = 0x800, scoped, tag = 'input window, operand 0, single buffered']
    #allocation3 [shape = 's32[1]{0}', space=sflag, size = 0x4, scoped, tag = 'scoped memory for tpu_custom_call.1']
    #allocation4 [shape = 's32[1]{0}', space=sflag, size = 0x4, scoped, tag = 'scoped memory for tpu_custom_call.1']
    #allocation5 [shape = 'u8[2048]{0}', space=vmem, size = 0x800, scoped, tag = 'input window, operand 1, single buffered']
    #allocation6 [shape = 's32[1]{0}', space=sflag, size = 0x4, scoped, tag = 'scoped memory for tpu_custom_call.1']
    #allocation7 [shape = 'u8[32768]{0}', space=vmem, size = 0x8000, scoped, tag = 'input window, operand 3, single buffered']
    #allocation8 [shape = 'u8[32768]{0}', space=vmem, size = 0x8000, scoped, tag = 'input window, operand 5, single buffered']
    #allocation9 [shape = 's32[1]{0}', space=sflag, size = 0x4, scoped, tag = 'scoped memory for tpu_custom_call.1']
    #allocation10 [shape = 'u8[32768]{0}', space=vmem, size = 0x8000, scoped, tag = 'input window, operand 7, single buffered']
    #allocation11 [shape = 'u8[32768]{0}', space=vmem, size = 0x8000, scoped, tag = 'input window, operand 9, single buffered']
    #allocation12 [shape = 's32[1]{0}', space=sflag, size = 0x4, scoped, tag = 'scoped memory for tpu_custom_call.1']
    #allocation13 [shape = 'u8[4096]{0}', space=vmem, size = 0x1000, scoped, tag = 'output window, operand 0, single buffered']
    %18 = vsyncpa [#allocation3], 0
    %19 = vsyncpa [#allocation6], 0
    %20 = vsyncpa [#allocation9], 0
    %21 = vsyncpa [#allocation12], 0
    %22 = vsyncpa [#allocation4], 0
    // Predicated region
    $region2: #{tpu_custom_call.1} parent=1 // pred_check
      _
    $region3: #{tpu_custom_call.1} parent=1 // pred_check_branch
      %24 = sbr.rel (0) target = $region5
    $region4: #{tpu_custom_call.1} parent=1 // pred_region
      %26 = vsyncadd [#allocation3], 0
      %s28 = sshll.u32 %s0, 4
      %s29 = int_to_ptr.hbm [resolvable:$true] %s28
      %s30 = sshll.u32 [#allocation2], 4
      %s31 = int_to_ptr.vmem [resolvable:$true] %s30
      %33 = dma.hbm_to_vmem [thread:$0]  %s29, 64, %s31, [#allocation3]
    $region5: #{tpu_custom_call.1} parent=1 // pred_fallthru
      _
    // Predicated region
    $region6: #{tpu_custom_call.1} parent=1 // pred_check
      _
    $region7: #{tpu_custom_call.1} parent=1 // pred_check_branch
      %35 = sbr.rel (0) target = $region9
    $region8: #{tpu_custom_call.1} parent=1 // pred_region
      %37 = vsyncadd [#allocation6], 0
      %s39 = sshll.u32 %s1, 4
      %s40 = int_to_ptr.hbm [resolvable:$true] %s39
      %s41 = sshll.u32 [#allocation5], 4
      %s42 = int_to_ptr.vmem [resolvable:$true] %s41
      %44 = dma.hbm_to_vmem [thread:$0]  %s40, 64, %s42, [#allocation6]
    $region9: #{tpu_custom_call.1} parent=1 // pred_fallthru
      _
    // Predicated region
    $region10: #{tpu_custom_call.1} parent=1 // pred_check
      _
    $region11: #{tpu_custom_call.1} parent=1 // pred_check_branch
      %46 = sbr.rel (0) target = $region13
    $region12: #{tpu_custom_call.1} parent=1 // pred_region
      _
    $region13: #{tpu_custom_call.1} parent=1 // pred_fallthru
      _
    // Predicated region
    $region14: #{tpu_custom_call.1} parent=1 // pred_check
      _
    $region15: #{tpu_custom_call.1} parent=1 // pred_check_branch
      %48 = sbr.rel (0) target = $region17
    $region16: #{tpu_custom_call.1} parent=1 // pred_region
      %50 = vsyncadd [#allocation6], 0
      %s51 = sshll.u32 %s3, 4
      %s52 = int_to_ptr.hbm [resolvable:$true] %s51
      %s53 = sshll.u32 [#allocation7], 4
      %s54 = int_to_ptr.vmem [resolvable:$true] %s53
      %59 = dma.hbm_to_vmem [thread:$0]  %s52, 1024, %s54, [#allocation6], 64, 64, 4
    $region17: #{tpu_custom_call.1} parent=1 // pred_fallthru
      _
    // Predicated region
    $region18: #{tpu_custom_call.1} parent=1 // pred_check
      _
    $region19: #{tpu_custom_call.1} parent=1 // pred_check_branch
      %61 = sbr.rel (0) target = $region21
    $region20: #{tpu_custom_call.1} parent=1 // pred_region
      _
    $region21: #{tpu_custom_call.1} parent=1 // pred_fallthru
      _
    // Predicated region
    $region22: #{tpu_custom_call.1} parent=1 // pred_check
      _
    $region23: #{tpu_custom_call.1} parent=1 // pred_check_branch
      %63 = sbr.rel (0) target = $region25
    $region24: #{tpu_custom_call.1} parent=1 // pred_region
      %65 = vsyncadd [#allocation9], 0
      %s66 = sshll.u32 %s5, 4
      %s67 = int_to_ptr.hbm [resolvable:$true] %s66
      %s68 = sshll.u32 [#allocation8], 4
      %s69 = int_to_ptr.vmem [resolvable:$true] %s68
      %74 = dma.hbm_to_vmem [thread:$0]  %s67, 1024, %s69, [#allocation9], 64, 64, 4
    $region25: #{tpu_custom_call.1} parent=1 // pred_fallthru
      _
    // Predicated region
    $region26: #{tpu_custom_call.1} parent=1 // pred_check
      _
    $region27: #{tpu_custom_call.1} parent=1 // pred_check_branch
      %76 = sbr.rel (0) target = $region29
    $region28: #{tpu_custom_call.1} parent=1 // pred_region
      _
    $region29: #{tpu_custom_call.1} parent=1 // pred_fallthru
      _
    // Predicated region
    $region30: #{tpu_custom_call.1} parent=1 // pred_check
      _
    $region31: #{tpu_custom_call.1} parent=1 // pred_check_branch
      %78 = sbr.rel (0) target = $region33
    $region32: #{tpu_custom_call.1} parent=1 // pred_region
      %80 = vsyncadd [#allocation9], 0
      %s81 = sshll.u32 %s7, 4
      %s82 = int_to_ptr.hbm [resolvable:$true] %s81
      %s83 = sshll.u32 [#allocation10], 4
      %s84 = int_to_ptr.vmem [resolvable:$true] %s83
      %89 = dma.hbm_to_vmem [thread:$0]  %s82, 1024, %s84, [#allocation9], 64, 64, 4
    $region33: #{tpu_custom_call.1} parent=1 // pred_fallthru
      _
    // Predicated region
    $region34: #{tpu_custom_call.1} parent=1 // pred_check
      _
    $region35: #{tpu_custom_call.1} parent=1 // pred_check_branch
      %91 = sbr.rel (0) target = $region37
    $region36: #{tpu_custom_call.1} parent=1 // pred_region
      _
    $region37: #{tpu_custom_call.1} parent=1 // pred_fallthru
      _
    // Predicated region
    $region38: #{tpu_custom_call.1} parent=1 // pred_check
      _
    $region39: #{tpu_custom_call.1} parent=1 // pred_check_branch
      %93 = sbr.rel (0) target = $region41
    $region40: #{tpu_custom_call.1} parent=1 // pred_region
      %95 = vsyncadd [#allocation12], 0
      %s96 = sshll.u32 %s9, 4
      %s97 = int_to_ptr.hbm [resolvable:$true] %s96
      %s98 = sshll.u32 [#allocation11], 4
      %s99 = int_to_ptr.vmem [resolvable:$true] %s98
      %104 = dma.hbm_to_vmem [thread:$0]  %s97, 1024, %s99, [#allocation12], 64, 64, 4
    $region41: #{tpu_custom_call.1} parent=1 // pred_fallthru
      _
    // Predicated region
    $region42: #{tpu_custom_call.1} parent=1 // pred_check
      _
    $region43: #{tpu_custom_call.1} parent=1 // pred_check_branch
      %106 = sbr.rel (0) target = $region45
    $region44: #{tpu_custom_call.1} parent=1 // pred_region
      _
    $region45: #{tpu_custom_call.1} parent=1 // pred_fallthru
      _
    // Predicated region
    $region46: #{tpu_custom_call.1} parent=1 // pred_check
      _
    $region47: #{tpu_custom_call.1} parent=1 // pred_check_branch
      %108 = sbr.rel (0) target = $region49
    $region48: #{tpu_custom_call.1} parent=1 // pred_region
      _
    $region49: #{tpu_custom_call.1} parent=1 // pred_fallthru
      _
    // Predicated region
    $region50: #{tpu_custom_call.1} parent=1 // pred_check
      _
    $region51: #{tpu_custom_call.1} parent=1 // pred_check_branch
      %110 = sbr.rel (0) target = $region53
    $region52: #{tpu_custom_call.1} parent=1 // pred_region
      _
    $region53: #{tpu_custom_call.1} parent=1 // pred_fallthru
      _
    // Predicated region
    $region54: #{tpu_custom_call.1} parent=1 // pred_check
      _
    $region55: #{tpu_custom_call.1} parent=1 // pred_check_branch
      %112 = sbr.rel (0) target = $region57
    $region56: #{tpu_custom_call.1} parent=1 // pred_region
      %114 = dma.done [#allocation3], 64
    $region57: #{tpu_custom_call.1} parent=1 // pred_fallthru
      _
    // Predicated region
    $region58: #{tpu_custom_call.1} parent=1 // pred_check
      _
    $region59: #{tpu_custom_call.1} parent=1 // pred_check_branch
      %116 = sbr.rel (0) target = $region61
    $region60: #{tpu_custom_call.1} parent=1 // pred_region
      %118 = dma.done [#allocation6], 64
    $region61: #{tpu_custom_call.1} parent=1 // pred_fallthru
      _
    // Predicated region
    $region62: #{tpu_custom_call.1} parent=1 // pred_check
      _
    $region63: #{tpu_custom_call.1} parent=1 // pred_check_branch
      %120 = sbr.rel (0) target = $region65
    $region64: #{tpu_custom_call.1} parent=1 // pred_region
      %122 = dma.done [#allocation6], 1024
    $region65: #{tpu_custom_call.1} parent=1 // pred_fallthru
      _
    // Predicated region
    $region66: #{tpu_custom_call.1} parent=1 // pred_check
      _
    $region67: #{tpu_custom_call.1} parent=1 // pred_check_branch
      %124 = sbr.rel (0) target = $region69
    $region68: #{tpu_custom_call.1} parent=1 // pred_region
      %126 = dma.done [#allocation9], 1024
    $region69: #{tpu_custom_call.1} parent=1 // pred_fallthru
      _
    // Predicated region
    $region70: #{tpu_custom_call.1} parent=1 // pred_check
      _
    $region71: #{tpu_custom_call.1} parent=1 // pred_check_branch
      %128 = sbr.rel (0) target = $region73
    $region72: #{tpu_custom_call.1} parent=1 // pred_region
      %130 = dma.done [#allocation9], 1024
    $region73: #{tpu_custom_call.1} parent=1 // pred_fallthru
      _
    // Predicated region
    $region74: #{tpu_custom_call.1} parent=1 // pred_check
      _
    $region75: #{tpu_custom_call.1} parent=1 // pred_check_branch
      %132 = sbr.rel (0) target = $region77
    $region76: #{tpu_custom_call.1} parent=1 // pred_region
      %134 = dma.done [#allocation12], 1024
    $region77: #{tpu_custom_call.1} parent=1 // pred_fallthru
      _
    %v136 = vld [vmem:[#allocation2] sm:$0xf]
    %v137 = vld [vmem:[#allocation5] sm:$0xf]
    %v138 = vld [vmem:[%s2] sm:$0x1]
    %v140 = vperm.slane %v138, 0
    %vm142 = vcmask 64512
    %v144 = vsel %vm142, %v136, 0
    %vm146 = vcmask 1043456
    %v148 = vsel %vm146, %v137, 0
    %150 = vmatpush.bf16.msra.mxu0 0
    %151 = vmatpush.bf16.msra.mxu0 0
    %152 = vmatpush.bf16.msra.mxu0 0
    %153 = vmatpush.bf16.msra.mxu0 0
    %154 = vmatpush.bf16.msra.mxu0 0
    %155 = vmatpush.bf16.msra.mxu0 0
    %156 = vmatpush.bf16.msra.mxu0 0
    %157 = vmatpush.bf16.msra.mxu0 %v148
    %158 = vmatmul.bf16.gmra.mxu0 %v144
    %v159 = vpop.f32.mrf.mxu0
    %v160 = vadd.f32 %v140, %v159
    %v161 = vpop.f32.mrf.mxu0
    %162 = vdwg.mxu0
    %v163 = vmax.f32 %v160, 0.0
    %v164 = vpack.c.bf16 %v163, %v163
    %v165 = vld [vmem:[#allocation7] sm:$0xf]
    %v166 = vld [vmem:[#allocation7 + $0x4] sm:$0xf]
    %v167 = vld [vmem:[#allocation7 + $0x8] sm:$0xf]
    %v168 = vld [vmem:[#allocation7 + $0xc] sm:$0xf]
    %v169 = vld [vmem:[#allocation7 + $0x10] sm:$0xf]
    %v170 = vld [vmem:[#allocation7 + $0x14] sm:$0xf]
    %v171 = vld [vmem:[#allocation7 + $0x18] sm:$0xf]
    %v172 = vld [vmem:[#allocation7 + $0x1c] sm:$0xf]
    %v173 = vld [vmem:[#allocation7 + $0x20] sm:$0xf]
    %v174 = vld [vmem:[#allocation7 + $0x24] sm:$0xf]
    %v175 = vld [vmem:[#allocation7 + $0x28] sm:$0xf]
    %v176 = vld [vmem:[#allocation7 + $0x2c] sm:$0xf]
    %v177 = vld [vmem:[#allocation7 + $0x30] sm:$0xf]
    %v178 = vld [vmem:[#allocation7 + $0x34] sm:$0xf]
    %v179 = vld [vmem:[#allocation7 + $0x38] sm:$0xf]
    %v180 = vld [vmem:[#allocation7 + $0x3c] sm:$0xf]
    %v181 = vld [vmem:[%s4] sm:$0x1]
    %v183 = vperm.slane %v181, 0
    %v201 = vunpack.c.l.b16 %v165
    %v202 = vunpack.c.l.b16 %v166
    %v203 = vunpack.c.l.b16 %v167
    %v204 = vunpack.c.l.b16 %v168
    %v205 = vunpack.c.l.b16 %v169
    %v206 = vunpack.c.l.b16 %v170
    %v207 = vunpack.c.l.b16 %v171
    %v208 = vunpack.c.l.b16 %v172
    %v209 = vunpack.c.l.b16 %v173
    %v210 = vunpack.c.l.b16 %v174
    %v211 = vunpack.c.l.b16 %v175
    %v212 = vunpack.c.l.b16 %v176
    %v213 = vunpack.c.l.b16 %v177
    %v214 = vunpack.c.l.b16 %v178
    %v215 = vunpack.c.l.b16 %v179
    %v216 = vunpack.c.l.b16 %v180
    %v217 = vpack.c.b16 %v202, %v201
    %v218 = vpack.c.b16 %v204, %v203
    %v219 = vpack.c.b16 %v206, %v205
    %v220 = vpack.c.b16 %v208, %v207
    %v221 = vpack.c.b16 %v210, %v209
    %v222 = vpack.c.b16 %v212, %v211
    %v223 = vpack.c.b16 %v214, %v213
    %v224 = vpack.c.b16 %v216, %v215
    %233 = vmatpush.bf16.msra.mxu0 %v224
    %234 = vmatpush.bf16.msra.mxu0 %v223
    %235 = vmatpush.bf16.msra.mxu0 %v222
    %236 = vmatpush.bf16.msra.mxu0 %v221
    %237 = vmatpush.bf16.msra.mxu0 %v220
    %238 = vmatpush.bf16.msra.mxu0 %v219
    %239 = vmatpush.bf16.msra.mxu0 %v218
    %240 = vmatpush.bf16.msra.mxu0 %v217
    %241 = vmatmul.bf16.gmra.mxu0 %v164
    %v242 = vpop.f32.mrf.mxu0
    %v243 = vadd.f32 %v183, %v242
    %v244 = vpop.f32.mrf.mxu0
    %245 = vdwg.mxu0
    %v246 = vmax.f32 %v243, 0.0
    %v247 = vpack.c.bf16 %v246, %v246
    %v248 = vld [vmem:[#allocation8] sm:$0xf]
    %v249 = vld [vmem:[#allocation8 + $0x4] sm:$0xf]
    %v250 = vld [vmem:[#allocation8 + $0x8] sm:$0xf]
    %v251 = vld [vmem:[#allocation8 + $0xc] sm:$0xf]
    %v252 = vld [vmem:[#allocation8 + $0x10] sm:$0xf]
    %v253 = vld [vmem:[#allocation8 + $0x14] sm:$0xf]
    %v254 = vld [vmem:[#allocation8 + $0x18] sm:$0xf]
    %v255 = vld [vmem:[#allocation8 + $0x1c] sm:$0xf]
    %v256 = vld [vmem:[#allocation8 + $0x20] sm:$0xf]
    %v257 = vld [vmem:[#allocation8 + $0x24] sm:$0xf]
    %v258 = vld [vmem:[#allocation8 + $0x28] sm:$0xf]
    %v259 = vld [vmem:[#allocation8 + $0x2c] sm:$0xf]
    %v260 = vld [vmem:[#allocation8 + $0x30] sm:$0xf]
    %v261 = vld [vmem:[#allocation8 + $0x34] sm:$0xf]
    %v262 = vld [vmem:[#allocation8 + $0x38] sm:$0xf]
    %v263 = vld [vmem:[#allocation8 + $0x3c] sm:$0xf]
    %v264 = vld [vmem:[%s6] sm:$0x1]
    %v266 = vperm.slane %v264, 0
    %v284 = vunpack.c.l.b16 %v248
    %v285 = vunpack.c.l.b16 %v249
    %v286 = vunpack.c.l.b16 %v250
    %v287 = vunpack.c.l.b16 %v251
    %v288 = vunpack.c.l.b16 %v252
    %v289 = vunpack.c.l.b16 %v253
    %v290 = vunpack.c.l.b16 %v254
    %v291 = vunpack.c.l.b16 %v255
    %v292 = vunpack.c.l.b16 %v256
    %v293 = vunpack.c.l.b16 %v257
    %v294 = vunpack.c.l.b16 %v258
    %v295 = vunpack.c.l.b16 %v259
    %v296 = vunpack.c.l.b16 %v260
    %v297 = vunpack.c.l.b16 %v261
    %v298 = vunpack.c.l.b16 %v262
    %v299 = vunpack.c.l.b16 %v263
    %v300 = vpack.c.b16 %v285, %v284
    %v301 = vpack.c.b16 %v287, %v286
    %v302 = vpack.c.b16 %v289, %v288
    %v303 = vpack.c.b16 %v291, %v290
    %v304 = vpack.c.b16 %v293, %v292
    %v305 = vpack.c.b16 %v295, %v294
    %v306 = vpack.c.b16 %v297, %v296
    %v307 = vpack.c.b16 %v299, %v298
    %316 = vmatpush.bf16.msra.mxu0 %v307
    %317 = vmatpush.bf16.msra.mxu0 %v306
    %318 = vmatpush.bf16.msra.mxu0 %v305
    %319 = vmatpush.bf16.msra.mxu0 %v304
    %320 = vmatpush.bf16.msra.mxu0 %v303
    %321 = vmatpush.bf16.msra.mxu0 %v302
    %322 = vmatpush.bf16.msra.mxu0 %v301
    %323 = vmatpush.bf16.msra.mxu0 %v300
    %324 = vmatmul.bf16.gmra.mxu0 %v247
    %v325 = vpop.f32.mrf.mxu0
    %v326 = vadd.f32 %v266, %v325
    %v327 = vpop.f32.mrf.mxu0
    %328 = vdwg.mxu0
    %v329 = vmax.f32 %v326, 0.0
    %v330 = vpack.c.bf16 %v329, %v329
    %v331 = vld [vmem:[#allocation10] sm:$0xf]
    %v332 = vld [vmem:[#allocation10 + $0x4] sm:$0xf]
    %v333 = vld [vmem:[#allocation10 + $0x8] sm:$0xf]
    %v334 = vld [vmem:[#allocation10 + $0xc] sm:$0xf]
    %v335 = vld [vmem:[#allocation10 + $0x10] sm:$0xf]
    %v336 = vld [vmem:[#allocation10 + $0x14] sm:$0xf]
    %v337 = vld [vmem:[#allocation10 + $0x18] sm:$0xf]
    %v338 = vld [vmem:[#allocation10 + $0x1c] sm:$0xf]
    %v339 = vld [vmem:[#allocation10 + $0x20] sm:$0xf]
    %v340 = vld [vmem:[#allocation10 + $0x24] sm:$0xf]
    %v341 = vld [vmem:[#allocation10 + $0x28] sm:$0xf]
    %v342 = vld [vmem:[#allocation10 + $0x2c] sm:$0xf]
    %v343 = vld [vmem:[#allocation10 + $0x30] sm:$0xf]
    %v344 = vld [vmem:[#allocation10 + $0x34] sm:$0xf]
    %v345 = vld [vmem:[#allocation10 + $0x38] sm:$0xf]
    %v346 = vld [vmem:[#allocation10 + $0x3c] sm:$0xf]
    %v347 = vld [vmem:[%s8] sm:$0x1]
    %v349 = vperm.slane %v347, 0
    %v367 = vunpack.c.l.b16 %v331
    %v368 = vunpack.c.l.b16 %v332
    %v369 = vunpack.c.l.b16 %v333
    %v370 = vunpack.c.l.b16 %v334
    %v371 = vunpack.c.l.b16 %v335
    %v372 = vunpack.c.l.b16 %v336
    %v373 = vunpack.c.l.b16 %v337
    %v374 = vunpack.c.l.b16 %v338
    %v375 = vunpack.c.l.b16 %v339
    %v376 = vunpack.c.l.b16 %v340
    %v377 = vunpack.c.l.b16 %v341
    %v378 = vunpack.c.l.b16 %v342
    %v379 = vunpack.c.l.b16 %v343
    %v380 = vunpack.c.l.b16 %v344
    %v381 = vunpack.c.l.b16 %v345
    %v382 = vunpack.c.l.b16 %v346
    %v383 = vpack.c.b16 %v368, %v367
    %v384 = vpack.c.b16 %v370, %v369
    %v385 = vpack.c.b16 %v372, %v371
    %v386 = vpack.c.b16 %v374, %v373
    %v387 = vpack.c.b16 %v376, %v375
    %v388 = vpack.c.b16 %v378, %v377
    %v389 = vpack.c.b16 %v380, %v379
    %v390 = vpack.c.b16 %v382, %v381
    %399 = vmatpush.bf16.msra.mxu0 %v390
    %400 = vmatpush.bf16.msra.mxu0 %v389
    %401 = vmatpush.bf16.msra.mxu0 %v388
    %402 = vmatpush.bf16.msra.mxu0 %v387
    %403 = vmatpush.bf16.msra.mxu0 %v386
    %404 = vmatpush.bf16.msra.mxu0 %v385
    %405 = vmatpush.bf16.msra.mxu0 %v384
    %406 = vmatpush.bf16.msra.mxu0 %v383
    %407 = vmatmul.bf16.gmra.mxu0 %v330
    %v408 = vpop.f32.mrf.mxu0
    %v409 = vadd.f32 %v349, %v408
    %v410 = vpop.f32.mrf.mxu0
    %411 = vdwg.mxu0
    %v412 = vmax.f32 %v409, 0.0
    %v413 = vpack.c.bf16 %v412, %v412
    %v414 = vld [vmem:[#allocation11] sm:$0xf]
    %v415 = vld [vmem:[#allocation11 + $0x4] sm:$0xf]
    %v416 = vld [vmem:[#allocation11 + $0x8] sm:$0xf]
    %v417 = vld [vmem:[#allocation11 + $0xc] sm:$0xf]
    %v418 = vld [vmem:[#allocation11 + $0x10] sm:$0xf]
    %v419 = vld [vmem:[#allocation11 + $0x14] sm:$0xf]
    %v420 = vld [vmem:[#allocation11 + $0x18] sm:$0xf]
    %v421 = vld [vmem:[#allocation11 + $0x1c] sm:$0xf]
    %v422 = vld [vmem:[#allocation11 + $0x20] sm:$0xf]
    %v423 = vld [vmem:[#allocation11 + $0x24] sm:$0xf]
    %v424 = vld [vmem:[#allocation11 + $0x28] sm:$0xf]
    %v425 = vld [vmem:[#allocation11 + $0x2c] sm:$0xf]
    %v426 = vld [vmem:[#allocation11 + $0x30] sm:$0xf]
    %v427 = vld [vmem:[#allocation11 + $0x34] sm:$0xf]
    %v428 = vld [vmem:[#allocation11 + $0x38] sm:$0xf]
    %v429 = vld [vmem:[#allocation11 + $0x3c] sm:$0xf]
    %v430 = vld [vmem:[%s10] sm:$0x1]
    %v432 = vperm.slane %v430, 0
    %v450 = vunpack.c.l.b16 %v414
    %v451 = vunpack.c.l.b16 %v415
    %v452 = vunpack.c.l.b16 %v416
    %v453 = vunpack.c.l.b16 %v417
    %v454 = vunpack.c.l.b16 %v418
    %v455 = vunpack.c.l.b16 %v419
    %v456 = vunpack.c.l.b16 %v420
    %v457 = vunpack.c.l.b16 %v421
    %v458 = vunpack.c.l.b16 %v422
    %v459 = vunpack.c.l.b16 %v423
    %v460 = vunpack.c.l.b16 %v424
    %v461 = vunpack.c.l.b16 %v425
    %v462 = vunpack.c.l.b16 %v426
    %v463 = vunpack.c.l.b16 %v427
    %v464 = vunpack.c.l.b16 %v428
    %v465 = vunpack.c.l.b16 %v429
    %v466 = vpack.c.b16 %v451, %v450
    %v467 = vpack.c.b16 %v453, %v452
    %v468 = vpack.c.b16 %v455, %v454
    %v469 = vpack.c.b16 %v457, %v456
    %v470 = vpack.c.b16 %v459, %v458
    %v471 = vpack.c.b16 %v461, %v460
    %v472 = vpack.c.b16 %v463, %v462
    %v473 = vpack.c.b16 %v465, %v464
    %482 = vmatpush.bf16.msra.mxu0 %v473
    %483 = vmatpush.bf16.msra.mxu0 %v472
    %484 = vmatpush.bf16.msra.mxu0 %v471
    %485 = vmatpush.bf16.msra.mxu0 %v470
    %486 = vmatpush.bf16.msra.mxu0 %v469
    %487 = vmatpush.bf16.msra.mxu0 %v468
    %488 = vmatpush.bf16.msra.mxu0 %v467
    %489 = vmatpush.bf16.msra.mxu0 %v466
    %490 = vmatmul.bf16.gmra.mxu0 %v413
    %v491 = vpop.f32.mrf.mxu0
    %v492 = vadd.f32 %v432, %v491
    %v493 = vpop.f32.mrf.mxu0
    %494 = vdwg.mxu0
    %v495 = vld [vmem:[%s11] sm:$0x1]
    %v497 = vperm.slane %v495, 0
    %v499 = vmax.f32 %v492, %v497
    %v500 = vld [vmem:[%s12] sm:$0x1]
    %v502 = vperm.slane %v500, 0
    %v504 = vmin.f32 %v499, %v502
    %505 = vst [vmem:[#allocation13] sm:$0xff] %v504
    // Predicated region
    $region78: #{tpu_custom_call.1} parent=1 // pred_check
      _
    $region79: #{tpu_custom_call.1} parent=1 // pred_check_branch
      %507 = sbr.rel (0) target = $region81
    $region80: #{tpu_custom_call.1} parent=1 // pred_region
      %509 = vsyncadd [#allocation4], 0
      %s511 = sshll.u32 [#allocation13], 4
      %s512 = int_to_ptr.vmem [resolvable:$true] %s511
      %s513 = sshll.u32 %s13, 4
      %s514 = int_to_ptr.hbm [resolvable:$true] %s513
      %516 = dma.vmem_to_hbm [thread:$0]  %s512, 128, %s514, [#allocation4]
    $region81: #{tpu_custom_call.1} parent=1 // pred_fallthru
      _
    // Predicated region
    $region82: #{tpu_custom_call.1} parent=1 // pred_check
      _
    $region83: #{tpu_custom_call.1} parent=1 // pred_check_branch
      %518 = sbr.rel (0) target = $region85
    $region84: #{tpu_custom_call.1} parent=1 // pred_region
      %520 = dma.done [#allocation4], 128
    $region85: #{tpu_custom_call.1} parent=1 // pred_fallthru
      _
    %521 = vsyncpa [#allocation3], 1
    %522 = vsyncpa [#allocation6], 1
    %523 = vsyncpa [#allocation9], 1
    %524 = vsyncpa [#allocation12], 1
    %525 = vsyncpa [#allocation4], 1

// kernel: tpu_custom_call.1
$region0: #{tpu_custom_call.1}
  #allocation0 [shape = 'u32[]', space=smem, size = 0x4, offset = 0x4, fixed_abs, tag = 'smem constant byte address 0x4 - core index']
  #allocation1 [shape = 'u32[72,128]{1,0:T(1,128)}', space=vmem, size = 0x9000, scoped, tag = 'internal scratch']
  %s0 = inlined_call_operand.hbm [shape: bf16[8,8], index: 0, kind: input, shape index: {}]
  %s1 = inlined_call_operand.hbm [shape: bf16[8,128], index: 1, kind: input, shape index: {}]
  %s2 = inlined_call_operand.vmem [shape: f32[1,128], index: 2, kind: input, shape index: {}]
  %s3 = inlined_call_operand.hbm [shape: bf16[128,128], index: 3, kind: input, shape index: {}]
  %s4 = inlined_call_operand.vmem [shape: f32[1,128], index: 4, kind: input, shape index: {}]
  %s5 = inlined_call_operand.hbm [shape: bf16[128,128], index: 5, kind: input, shape index: {}]
  %s6 = inlined_call_operand.vmem [shape: f32[1,128], index: 6, kind: input, shape index: {}]
  %s7 = inlined_call_operand.hbm [shape: bf16[128,128], index: 7, kind: input, shape index: {}]
  %s8 = inlined_call_operand.vmem [shape: f32[1,128], index: 8, kind: input, shape index: {}]
  %s9 = inlined_call_operand.hbm [shape: bf16[128,128], index: 9, kind: input, shape index: {}]
  %s10 = inlined_call_operand.vmem [shape: f32[1,128], index: 10, kind: input, shape index: {}]
  %s11 = inlined_call_operand.vmem [shape: f32[1,128], index: 11, kind: input, shape index: {}]
  %s12 = inlined_call_operand.vmem [shape: f32[1,128], index: 12, kind: input, shape index: {}]
  %s13 = inlined_call_operand.hbm [shape: f32[8,128], index: 13, kind: output, shape index: {}]
  %s14 = sld [smem:[#allocation0]]
  $region86: #{tpu_custom_call.1} parent=0
    _
  %s16 = ssub.s32 1, %s14
  %s17 = scalar_select 0, %s16, %s14
  $region1: #{tpu_custom_call.1} parent=0
    #allocation2 [shape = 'u8[2048]{0}', space=vmem, size = 0x800, scoped, tag = 'input window, operand 0, single buffered']
    #allocation3 [shape = 's32[1]{0}', space=sflag, size = 0x4, scoped, tag = 'scoped memory for tpu_custom_call.1']
    #allocation4 [shape = 's32[1]{0}', space=sflag, size = 0x4, scoped, tag = 'scoped memory for tpu_custom_call.1']
    #allocation5 [shape = 'u8[2048]{0}', space=vmem, size = 0x800, scoped, tag = 'input window, operand 1, single buffered']
    #allocation6 [shape = 's32[1]{0}', space=sflag, size = 0x4, scoped, tag = 'scoped memory for tpu_custom_call.1']
    #allocation7 [shape = 'u8[32768]{0}', space=vmem, size = 0x8000, scoped, tag = 'input window, operand 3, single buffered']
    #allocation8 [shape = 'u8[32768]{0}', space=vmem, size = 0x8000, scoped, tag = 'input window, operand 5, single buffered']
    #allocation9 [shape = 's32[1]{0}', space=sflag, size = 0x4, scoped, tag = 'scoped memory for tpu_custom_call.1']
    #allocation10 [shape = 'u8[32768]{0}', space=vmem, size = 0x8000, scoped, tag = 'input window, operand 7, single buffered']
    #allocation11 [shape = 'u8[32768]{0}', space=vmem, size = 0x8000, scoped, tag = 'input window, operand 9, single buffered']
    #allocation12 [shape = 's32[1]{0}', space=sflag, size = 0x4, scoped, tag = 'scoped memory for tpu_custom_call.1']
    #allocation13 [shape = 'u8[4096]{0}', space=vmem, size = 0x1000, scoped, tag = 'output window, operand 0, single buffered']
    %18 = vsyncpa [#allocation3], 0
    %19 = vsyncpa [#allocation6], 0
    %20 = vsyncpa [#allocation9], 0
    %21 = vsyncpa [#allocation12], 0
    %22 = vsyncpa [#allocation4], 0
    // Predicated region
    $region2: #{tpu_custom_call.1} parent=1 // pred_check
      _
    $region3: #{tpu_custom_call.1} parent=1 // pred_check_branch
      %24 = sbr.rel (0) target = $region5
    $region4: #{tpu_custom_call.1} parent=1 // pred_region
      %26 = vsyncadd [#allocation3], 0
      %s28 = sshll.u32 %s0, 4
      %s29 = int_to_ptr.hbm [resolvable:$true] %s28
      %s30 = sshll.u32 [#allocation2], 4
      %s31 = int_to_ptr.vmem [resolvable:$true] %s30
      %33 = dma.hbm_to_vmem [thread:$0]  %s29, 64, %s31, [#allocation3]
    $region5: #{tpu_custom_call.1} parent=1 // pred_fallthru
      _
    // Predicated region
    $region6: #{tpu_custom_call.1} parent=1 // pred_check
      _
    $region7: #{tpu_custom_call.1} parent=1 // pred_check_branch
      %35 = sbr.rel (0) target = $region9
    $region8: #{tpu_custom_call.1} parent=1 // pred_region
      %37 = vsyncadd [#allocation6], 0
      %s39 = sshll.u32 %s1, 4
      %s40 = int_to_ptr.hbm [resolvable:$true] %s39
      %s41 = sshll.u32 [#allocation5], 4
      %s42 = int_to_ptr.vmem [resolvable:$true] %s41
      %44 = dma.hbm_to_vmem [thread:$0]  %s40, 64, %s42, [#allocation6]
    $region9: #{tpu_custom_call.1} parent=1 // pred_fallthru
      _
    // Predicated region
    $region10: #{tpu_custom_call.1} parent=1 // pred_check
      _
    $region11: #{tpu_custom_call.1} parent=1 // pred_check_branch
      %46 = sbr.rel (0) target = $region13
    $region12: #{tpu_custom_call.1} parent=1 // pred_region
      _
    $region13: #{tpu_custom_call.1} parent=1 // pred_fallthru
      _
    // Predicated region
    $region14: #{tpu_custom_call.1} parent=1 // pred_check
      _
    $region15: #{tpu_custom_call.1} parent=1 // pred_check_branch
      %48 = sbr.rel (0) target = $region17
    $region16: #{tpu_custom_call.1} parent=1 // pred_region
      %50 = vsyncadd [#allocation6], 0
      %s51 = sshll.u32 %s3, 4
      %s52 = int_to_ptr.hbm [resolvable:$true] %s51
      %s53 = sshll.u32 [#allocation7], 4
      %s54 = int_to_ptr.vmem [resolvable:$true] %s53
      %59 = dma.hbm_to_vmem [thread:$0]  %s52, 1024, %s54, [#allocation6], 64, 64, 4
    $region17: #{tpu_custom_call.1} parent=1 // pred_fallthru
      _
    // Predicated region
    $region18: #{tpu_custom_call.1} parent=1 // pred_check
      _
    $region19: #{tpu_custom_call.1} parent=1 // pred_check_branch
      %61 = sbr.rel (0) target = $region21
    $region20: #{tpu_custom_call.1} parent=1 // pred_region
      _
    $region21: #{tpu_custom_call.1} parent=1 // pred_fallthru
      _
    // Predicated region
    $region22: #{tpu_custom_call.1} parent=1 // pred_check
      _
    $region23: #{tpu_custom_call.1} parent=1 // pred_check_branch
      %63 = sbr.rel (0) target = $region25
    $region24: #{tpu_custom_call.1} parent=1 // pred_region
      %65 = vsyncadd [#allocation9], 0
      %s66 = sshll.u32 %s5, 4
      %s67 = int_to_ptr.hbm [resolvable:$true] %s66
      %s68 = sshll.u32 [#allocation8], 4
      %s69 = int_to_ptr.vmem [resolvable:$true] %s68
      %74 = dma.hbm_to_vmem [thread:$0]  %s67, 1024, %s69, [#allocation9], 64, 64, 4
    $region25: #{tpu_custom_call.1} parent=1 // pred_fallthru
      _
    // Predicated region
    $region26: #{tpu_custom_call.1} parent=1 // pred_check
      _
    $region27: #{tpu_custom_call.1} parent=1 // pred_check_branch
      %76 = sbr.rel (0) target = $region29
    $region28: #{tpu_custom_call.1} parent=1 // pred_region
      _
    $region29: #{tpu_custom_call.1} parent=1 // pred_fallthru
      _
    // Predicated region
    $region30: #{tpu_custom_call.1} parent=1 // pred_check
      _
    $region31: #{tpu_custom_call.1} parent=1 // pred_check_branch
      %78 = sbr.rel (0) target = $region33
    $region32: #{tpu_custom_call.1} parent=1 // pred_region
      %80 = vsyncadd [#allocation9], 0
      %s81 = sshll.u32 %s7, 4
      %s82 = int_to_ptr.hbm [resolvable:$true] %s81
      %s83 = sshll.u32 [#allocation10], 4
      %s84 = int_to_ptr.vmem [resolvable:$true] %s83
      %89 = dma.hbm_to_vmem [thread:$0]  %s82, 1024, %s84, [#allocation9], 64, 64, 4
    $region33: #{tpu_custom_call.1} parent=1 // pred_fallthru
      _
    // Predicated region
    $region34: #{tpu_custom_call.1} parent=1 // pred_check
      _
    $region35: #{tpu_custom_call.1} parent=1 // pred_check_branch
      %91 = sbr.rel (0) target = $region37
    $region36: #{tpu_custom_call.1} parent=1 // pred_region
      _
    $region37: #{tpu_custom_call.1} parent=1 // pred_fallthru
      _
    // Predicated region
    $region38: #{tpu_custom_call.1} parent=1 // pred_check
      _
    $region39: #{tpu_custom_call.1} parent=1 // pred_check_branch
      %93 = sbr.rel (0) target = $region41
    $region40: #{tpu_custom_call.1} parent=1 // pred_region
      %95 = vsyncadd [#allocation12], 0
      %s96 = sshll.u32 %s9, 4
      %s97 = int_to_ptr.hbm [resolvable:$true] %s96
      %s98 = sshll.u32 [#allocation11], 4
      %s99 = int_to_ptr.vmem [resolvable:$true] %s98
      %104 = dma.hbm_to_vmem [thread:$0]  %s97, 1024, %s99, [#allocation12], 64, 64, 4
    $region41: #{tpu_custom_call.1} parent=1 // pred_fallthru
      _
    // Predicated region
    $region42: #{tpu_custom_call.1} parent=1 // pred_check
      _
    $region43: #{tpu_custom_call.1} parent=1 // pred_check_branch
      %106 = sbr.rel (0) target = $region45
    $region44: #{tpu_custom_call.1} parent=1 // pred_region
      _
    $region45: #{tpu_custom_call.1} parent=1 // pred_fallthru
      _
    // Predicated region
    $region46: #{tpu_custom_call.1} parent=1 // pred_check
      _
    $region47: #{tpu_custom_call.1} parent=1 // pred_check_branch
      %108 = sbr.rel (0) target = $region49
    $region48: #{tpu_custom_call.1} parent=1 // pred_region
      _
    $region49: #{tpu_custom_call.1} parent=1 // pred_fallthru
      _
    // Predicated region
    $region50: #{tpu_custom_call.1} parent=1 // pred_check
      _
    $region51: #{tpu_custom_call.1} parent=1 // pred_check_branch
      %110 = sbr.rel (0) target = $region53
    $region52: #{tpu_custom_call.1} parent=1 // pred_region
      _
    $region53: #{tpu_custom_call.1} parent=1 // pred_fallthru
      _
    // Predicated region
    $region54: #{tpu_custom_call.1} parent=1 // pred_check
      _
    $region55: #{tpu_custom_call.1} parent=1 // pred_check_branch
      %112 = sbr.rel (0) target = $region57
    $region56: #{tpu_custom_call.1} parent=1 // pred_region
      %114 = dma.done [#allocation3], 64
    $region57: #{tpu_custom_call.1} parent=1 // pred_fallthru
      _
    // Predicated region
    $region58: #{tpu_custom_call.1} parent=1 // pred_check
      _
    $region59: #{tpu_custom_call.1} parent=1 // pred_check_branch
      %116 = sbr.rel (0) target = $region61
    $region60: #{tpu_custom_call.1} parent=1 // pred_region
      %118 = dma.done [#allocation6], 64
    $region61: #{tpu_custom_call.1} parent=1 // pred_fallthru
      _
    // Predicated region
    $region62: #{tpu_custom_call.1} parent=1 // pred_check
      _
    $region63: #{tpu_custom_call.1} parent=1 // pred_check_branch
      %120 = sbr.rel (0) target = $region65
    $region64: #{tpu_custom_call.1} parent=1 // pred_region
      %122 = dma.done [#allocation6], 1024
    $region65: #{tpu_custom_call.1} parent=1 // pred_fallthru
      _
    // Predicated region
    $region66: #{tpu_custom_call.1} parent=1 // pred_check
      _
    $region67: #{tpu_custom_call.1} parent=1 // pred_check_branch
      %124 = sbr.rel (0) target = $region69
    $region68: #{tpu_custom_call.1} parent=1 // pred_region
      %126 = dma.done [#allocation9], 1024
    $region69: #{tpu_custom_call.1} parent=1 // pred_fallthru
      _
    // Predicated region
    $region70: #{tpu_custom_call.1} parent=1 // pred_check
      _
    $region71: #{tpu_custom_call.1} parent=1 // pred_check_branch
      %128 = sbr.rel (0) target = $region73
    $region72: #{tpu_custom_call.1} parent=1 // pred_region
      %130 = dma.done [#allocation9], 1024
    $region73: #{tpu_custom_call.1} parent=1 // pred_fallthru
      _
    // Predicated region
    $region74: #{tpu_custom_call.1} parent=1 // pred_check
      _
    $region75: #{tpu_custom_call.1} parent=1 // pred_check_branch
      %132 = sbr.rel (0) target = $region77
    $region76: #{tpu_custom_call.1} parent=1 // pred_region
      %134 = dma.done [#allocation12], 1024
    $region77: #{tpu_custom_call.1} parent=1 // pred_fallthru
      _
    %v136 = vld [vmem:[#allocation2] sm:$0xf]
    %v137 = vld [vmem:[#allocation5] sm:$0xf]
    %v138 = vld [vmem:[%s2] sm:$0x1]
    %v140 = vperm.slane %v138, 0
    %vm142 = vcmask 64512
    %v144 = vsel %vm142, %v136, 0
    %vm146 = vcmask 1043456
    %v148 = vsel %vm146, %v137, 0
    %150 = vmatpush.bf16.msra.mxu0 0
    %151 = vmatpush.bf16.msra.mxu0 0
    %152 = vmatpush.bf16.msra.mxu0 0
    %153 = vmatpush.bf16.msra.mxu0 0
    %154 = vmatpush.bf16.msra.mxu0 0
    %155 = vmatpush.bf16.msra.mxu0 0
    %156 = vmatpush.bf16.msra.mxu0 0
    %157 = vmatpush.bf16.msra.mxu0 %v148
    %158 = vmatmul.bf16.gmra.mxu0 %v144
    %v159 = vpop.f32.mrf.mxu0
    %v160 = vadd.f32 %v140, %v159
    %v161 = vpop.f32.mrf.mxu0
    %162 = vdwg.mxu0
    %v163 = vmax.f32 %v160, 0.0
    %v164 = vpack.c.bf16 %v163, %v163
    %v165 = vld [vmem:[#allocation7] sm:$0xf]
    %v166 = vld [vmem:[#allocation7 + $0x4] sm:$0xf]
    %v167 = vld [vmem:[#allocation7 + $0x8] sm:$0xf]
    %v168 = vld [vmem:[#allocation7 + $0xc] sm:$0xf]
    %v169 = vld [vmem:[#allocation7 + $0x10] sm:$0xf]
    %v170 = vld [vmem:[#allocation7 + $0x14] sm:$0xf]
    %v171 = vld [vmem:[#allocation7 + $0x18] sm:$0xf]
    %v172 = vld [vmem:[#allocation7 + $0x1c] sm:$0xf]
    %v173 = vld [vmem:[#allocation7 + $0x20] sm:$0xf]
    %v174 = vld [vmem:[#allocation7 + $0x24] sm:$0xf]
    %v175 = vld [vmem:[#allocation7 + $0x28] sm:$0xf]
    %v176 = vld [vmem:[#allocation7 + $0x2c] sm:$0xf]
    %v177 = vld [vmem:[#allocation7 + $0x30] sm:$0xf]
    %v178 = vld [vmem:[#allocation7 + $0x34] sm:$0xf]
    %v179 = vld [vmem:[#allocation7 + $0x38] sm:$0xf]
    %v180 = vld [vmem:[#allocation7 + $0x3c] sm:$0xf]
    %v181 = vld [vmem:[%s4] sm:$0x1]
    %v183 = vperm.slane %v181, 0
    %v201 = vunpack.c.l.b16 %v165
    %v202 = vunpack.c.l.b16 %v166
    %v203 = vunpack.c.l.b16 %v167
    %v204 = vunpack.c.l.b16 %v168
    %v205 = vunpack.c.l.b16 %v169
    %v206 = vunpack.c.l.b16 %v170
    %v207 = vunpack.c.l.b16 %v171
    %v208 = vunpack.c.l.b16 %v172
    %v209 = vunpack.c.l.b16 %v173
    %v210 = vunpack.c.l.b16 %v174
    %v211 = vunpack.c.l.b16 %v175
    %v212 = vunpack.c.l.b16 %v176
    %v213 = vunpack.c.l.b16 %v177
    %v214 = vunpack.c.l.b16 %v178
    %v215 = vunpack.c.l.b16 %v179
    %v216 = vunpack.c.l.b16 %v180
    %v217 = vpack.c.b16 %v202, %v201
    %v218 = vpack.c.b16 %v204, %v203
    %v219 = vpack.c.b16 %v206, %v205
    %v220 = vpack.c.b16 %v208, %v207
    %v221 = vpack.c.b16 %v210, %v209
    %v222 = vpack.c.b16 %v212, %v211
    %v223 = vpack.c.b16 %v214, %v213
    %v224 = vpack.c.b16 %v216, %v215
    %233 = vmatpush.bf16.msra.mxu0 %v224
    %234 = vmatpush.bf16.msra.mxu0 %v223
    %235 = vmatpush.bf16.msra.mxu0 %v222
    %236 = vmatpush.bf16.msra.mxu0 %v221
    %237 = vmatpush.bf16.msra.mxu0 %v220
    %238 = vmatpush.bf16.msra.mxu0 %v219
    %239 = vmatpush.bf16.msra.mxu0 %v218
    %240 = vmatpush.bf16.msra.mxu0 %v217
    %241 = vmatmul.bf16.gmra.mxu0 %v164
    %v242 = vpop.f32.mrf.mxu0
    %v243 = vadd.f32 %v183, %v242
    %v244 = vpop.f32.mrf.mxu0
    %245 = vdwg.mxu0
    %v246 = vmax.f32 %v243, 0.0
    %v247 = vpack.c.bf16 %v246, %v246
    %v248 = vld [vmem:[#allocation8] sm:$0xf]
    %v249 = vld [vmem:[#allocation8 + $0x4] sm:$0xf]
    %v250 = vld [vmem:[#allocation8 + $0x8] sm:$0xf]
    %v251 = vld [vmem:[#allocation8 + $0xc] sm:$0xf]
    %v252 = vld [vmem:[#allocation8 + $0x10] sm:$0xf]
    %v253 = vld [vmem:[#allocation8 + $0x14] sm:$0xf]
    %v254 = vld [vmem:[#allocation8 + $0x18] sm:$0xf]
    %v255 = vld [vmem:[#allocation8 + $0x1c] sm:$0xf]
    %v256 = vld [vmem:[#allocation8 + $0x20] sm:$0xf]
    %v257 = vld [vmem:[#allocation8 + $0x24] sm:$0xf]
    %v258 = vld [vmem:[#allocation8 + $0x28] sm:$0xf]
    %v259 = vld [vmem:[#allocation8 + $0x2c] sm:$0xf]
    %v260 = vld [vmem:[#allocation8 + $0x30] sm:$0xf]
    %v261 = vld [vmem:[#allocation8 + $0x34] sm:$0xf]
    %v262 = vld [vmem:[#allocation8 + $0x38] sm:$0xf]
    %v263 = vld [vmem:[#allocation8 + $0x3c] sm:$0xf]
    %v264 = vld [vmem:[%s6] sm:$0x1]
    %v266 = vperm.slane %v264, 0
    %v284 = vunpack.c.l.b16 %v248
    %v285 = vunpack.c.l.b16 %v249
    %v286 = vunpack.c.l.b16 %v250
    %v287 = vunpack.c.l.b16 %v251
    %v288 = vunpack.c.l.b16 %v252
    %v289 = vunpack.c.l.b16 %v253
    %v290 = vunpack.c.l.b16 %v254
    %v291 = vunpack.c.l.b16 %v255
    %v292 = vunpack.c.l.b16 %v256
    %v293 = vunpack.c.l.b16 %v257
    %v294 = vunpack.c.l.b16 %v258
    %v295 = vunpack.c.l.b16 %v259
    %v296 = vunpack.c.l.b16 %v260
    %v297 = vunpack.c.l.b16 %v261
    %v298 = vunpack.c.l.b16 %v262
    %v299 = vunpack.c.l.b16 %v263
    %v300 = vpack.c.b16 %v285, %v284
    %v301 = vpack.c.b16 %v287, %v286
    %v302 = vpack.c.b16 %v289, %v288
    %v303 = vpack.c.b16 %v291, %v290
    %v304 = vpack.c.b16 %v293, %v292
    %v305 = vpack.c.b16 %v295, %v294
    %v306 = vpack.c.b16 %v297, %v296
    %v307 = vpack.c.b16 %v299, %v298
    %316 = vmatpush.bf16.msra.mxu0 %v307
    %317 = vmatpush.bf16.msra.mxu0 %v306
    %318 = vmatpush.bf16.msra.mxu0 %v305
    %319 = vmatpush.bf16.msra.mxu0 %v304
    %320 = vmatpush.bf16.msra.mxu0 %v303
    %321 = vmatpush.bf16.msra.mxu0 %v302
    %322 = vmatpush.bf16.msra.mxu0 %v301
    %323 = vmatpush.bf16.msra.mxu0 %v300
    %324 = vmatmul.bf16.gmra.mxu0 %v247
    %v325 = vpop.f32.mrf.mxu0
    %v326 = vadd.f32 %v266, %v325
    %v327 = vpop.f32.mrf.mxu0
    %328 = vdwg.mxu0
    %v329 = vmax.f32 %v326, 0.0
    %v330 = vpack.c.bf16 %v329, %v329
    %v331 = vld [vmem:[#allocation10] sm:$0xf]
    %v332 = vld [vmem:[#allocation10 + $0x4] sm:$0xf]
    %v333 = vld [vmem:[#allocation10 + $0x8] sm:$0xf]
    %v334 = vld [vmem:[#allocation10 + $0xc] sm:$0xf]
    %v335 = vld [vmem:[#allocation10 + $0x10] sm:$0xf]
    %v336 = vld [vmem:[#allocation10 + $0x14] sm:$0xf]
    %v337 = vld [vmem:[#allocation10 + $0x18] sm:$0xf]
    %v338 = vld [vmem:[#allocation10 + $0x1c] sm:$0xf]
    %v339 = vld [vmem:[#allocation10 + $0x20] sm:$0xf]
    %v340 = vld [vmem:[#allocation10 + $0x24] sm:$0xf]
    %v341 = vld [vmem:[#allocation10 + $0x28] sm:$0xf]
    %v342 = vld [vmem:[#allocation10 + $0x2c] sm:$0xf]
    %v343 = vld [vmem:[#allocation10 + $0x30] sm:$0xf]
    %v344 = vld [vmem:[#allocation10 + $0x34] sm:$0xf]
    %v345 = vld [vmem:[#allocation10 + $0x38] sm:$0xf]
    %v346 = vld [vmem:[#allocation10 + $0x3c] sm:$0xf]
    %v347 = vld [vmem:[%s8] sm:$0x1]
    %v349 = vperm.slane %v347, 0
    %v367 = vunpack.c.l.b16 %v331
    %v368 = vunpack.c.l.b16 %v332
    %v369 = vunpack.c.l.b16 %v333
    %v370 = vunpack.c.l.b16 %v334
    %v371 = vunpack.c.l.b16 %v335
    %v372 = vunpack.c.l.b16 %v336
    %v373 = vunpack.c.l.b16 %v337
    %v374 = vunpack.c.l.b16 %v338
    %v375 = vunpack.c.l.b16 %v339
    %v376 = vunpack.c.l.b16 %v340
    %v377 = vunpack.c.l.b16 %v341
    %v378 = vunpack.c.l.b16 %v342
    %v379 = vunpack.c.l.b16 %v343
    %v380 = vunpack.c.l.b16 %v344
    %v381 = vunpack.c.l.b16 %v345
    %v382 = vunpack.c.l.b16 %v346
    %v383 = vpack.c.b16 %v368, %v367
    %v384 = vpack.c.b16 %v370, %v369
    %v385 = vpack.c.b16 %v372, %v371
    %v386 = vpack.c.b16 %v374, %v373
    %v387 = vpack.c.b16 %v376, %v375
    %v388 = vpack.c.b16 %v378, %v377
    %v389 = vpack.c.b16 %v380, %v379
    %v390 = vpack.c.b16 %v382, %v381
    %399 = vmatpush.bf16.msra.mxu0 %v390
    %400 = vmatpush.bf16.msra.mxu0 %v389
    %401 = vmatpush.bf16.msra.mxu0 %v388
    %402 = vmatpush.bf16.msra.mxu0 %v387
    %403 = vmatpush.bf16.msra.mxu0 %v386
    %404 = vmatpush.bf16.msra.mxu0 %v385
    %405 = vmatpush.bf16.msra.mxu0 %v384
    %406 = vmatpush.bf16.msra.mxu0 %v383
    %407 = vmatmul.bf16.gmra.mxu0 %v330
    %v408 = vpop.f32.mrf.mxu0
    %v409 = vadd.f32 %v349, %v408
    %v410 = vpop.f32.mrf.mxu0
    %411 = vdwg.mxu0
    %v412 = vmax.f32 %v409, 0.0
    %v413 = vpack.c.bf16 %v412, %v412
    %v414 = vld [vmem:[#allocation11] sm:$0xf]
    %v415 = vld [vmem:[#allocation11 + $0x4] sm:$0xf]
    %v416 = vld [vmem:[#allocation11 + $0x8] sm:$0xf]
    %v417 = vld [vmem:[#allocation11 + $0xc] sm:$0xf]
    %v418 = vld [vmem:[#allocation11 + $0x10] sm:$0xf]
    %v419 = vld [vmem:[#allocation11 + $0x14] sm:$0xf]
    %v420 = vld [vmem:[#allocation11 + $0x18] sm:$0xf]
    %v421 = vld [vmem:[#allocation11 + $0x1c] sm:$0xf]
    %v422 = vld [vmem:[#allocation11 + $0x20] sm:$0xf]
    %v423 = vld [vmem:[#allocation11 + $0x24] sm:$0xf]
    %v424 = vld [vmem:[#allocation11 + $0x28] sm:$0xf]
    %v425 = vld [vmem:[#allocation11 + $0x2c] sm:$0xf]
    %v426 = vld [vmem:[#allocation11 + $0x30] sm:$0xf]
    %v427 = vld [vmem:[#allocation11 + $0x34] sm:$0xf]
    %v428 = vld [vmem:[#allocation11 + $0x38] sm:$0xf]
    %v429 = vld [vmem:[#allocation11 + $0x3c] sm:$0xf]
    %v430 = vld [vmem:[%s10] sm:$0x1]
    %v432 = vperm.slane %v430, 0
    %v450 = vunpack.c.l.b16 %v414
    %v451 = vunpack.c.l.b16 %v415
    %v452 = vunpack.c.l.b16 %v416
    %v453 = vunpack.c.l.b16 %v417
    %v454 = vunpack.c.l.b16 %v418
    %v455 = vunpack.c.l.b16 %v419
    %v456 = vunpack.c.l.b16 %v420
    %v457 = vunpack.c.l.b16 %v421
    %v458 = vunpack.c.l.b16 %v422
    %v459 = vunpack.c.l.b16 %v423
    %v460 = vunpack.c.l.b16 %v424
    %v461 = vunpack.c.l.b16 %v425
    %v462 = vunpack.c.l.b16 %v426
    %v463 = vunpack.c.l.b16 %v427
    %v464 = vunpack.c.l.b16 %v428
    %v465 = vunpack.c.l.b16 %v429
    %v466 = vpack.c.b16 %v451, %v450
    %v467 = vpack.c.b16 %v453, %v452
    %v468 = vpack.c.b16 %v455, %v454
    %v469 = vpack.c.b16 %v457, %v456
    %v470 = vpack.c.b16 %v459, %v458
    %v471 = vpack.c.b16 %v461, %v460
    %v472 = vpack.c.b16 %v463, %v462
    %v473 = vpack.c.b16 %v465, %v464
    %482 = vmatpush.bf16.msra.mxu0 %v473
    %483 = vmatpush.bf16.msra.mxu0 %v472
    %484 = vmatpush.bf16.msra.mxu0 %v471
    %485 = vmatpush.bf16.msra.mxu0 %v470
    %486 = vmatpush.bf16.msra.mxu0 %v469
    %487 = vmatpush.bf16.msra.mxu0 %v468
    %488 = vmatpush.bf16.msra.mxu0 %v467
    %489 = vmatpush.bf16.msra.mxu0 %v466
    %490 = vmatmul.bf16.gmra.mxu0 %v413
    %v491 = vpop.f32.mrf.mxu0
    %v492 = vadd.f32 %v432, %v491
    %v493 = vpop.f32.mrf.mxu0
    %494 = vdwg.mxu0
    %v495 = vld [vmem:[%s11] sm:$0x1]
    %v497 = vperm.slane %v495, 0
    %v499 = vmax.f32 %v492, %v497
    %v500 = vld [vmem:[%s12] sm:$0x1]
    %v502 = vperm.slane %v500, 0
    %v504 = vmin.f32 %v499, %v502
    %505 = vst [vmem:[#allocation13] sm:$0xff] %v504
    // Predicated region
    $region78: #{tpu_custom_call.1} parent=1 // pred_check
      _
    $region79: #{tpu_custom_call.1} parent=1 // pred_check_branch
      %507 = sbr.rel (0) target = $region81
    $region80: #{tpu_custom_call.1} parent=1 // pred_region
      %509 = vsyncadd [#allocation4], 0
      %s511 = sshll.u32 [#allocation13], 4
      %s512 = int_to_ptr.vmem [resolvable:$true] %s511
      %s513 = sshll.u32 %s13, 4
      %s514 = int_to_ptr.hbm [resolvable:$true] %s513
      %516 = dma.vmem_to_hbm [thread:$0]  %s512, 128, %s514, [#allocation4]
    $region81: #{tpu_custom_call.1} parent=1 // pred_fallthru
      _
    // Predicated region
    $region82: #{tpu_custom_call.1} parent=1 // pred_check
      _
    $region83: #{tpu_custom_call.1} parent=1 // pred_check_branch
      %518 = sbr.rel (0) target = $region85
    $region84: #{tpu_custom_call.1} parent=1 // pred_region
      %520 = dma.done [#allocation4], 128
    $region85: #{tpu_custom_call.1} parent=1 // pred_fallthru
      _
    %521 = vsyncpa [#allocation3], 1
    %522 = vsyncpa [#allocation6], 1
    %523 = vsyncpa [#allocation9], 1
    %524 = vsyncpa [#allocation12], 1
    %525 = vsyncpa [#allocation4], 1

</llo_original>
